<compile_context>
chip_gen: v7x
topology: tpu7x:2x2x1
jax: 0.10.0
libtpu: 0.0.40
codegen_flags: <defaults>
</compile_context>

<pallas_src>
import functools

import jax
import jax.numpy as jnp
from jax.experimental import pallas as pl
from jax.experimental.pallas import tpu as pltpu


def _round_up(x, m):
    return (x + m - 1) // m * m


def _pick_tile(dim, candidates):
    for c in candidates:
        if dim % c == 0:
            return c
    return dim


# ---------------------------------------------------------------------------
# Kernel 1: tiled matmul + bias (+ optional ReLU), f32 VMEM accumulator
# ---------------------------------------------------------------------------
def _matmul_bias_kernel(x_ref, w_ref, b_ref, o_ref, acc_ref, *, relu):
    @pl.when(pl.program_id(2) == 0)
    def _():
        acc_ref[...] = jnp.zeros_like(acc_ref)

    acc_ref[...] += jnp.dot(x_ref[...], w_ref[...],
                            preferred_element_type=jnp.float32)

    @pl.when(pl.program_id(2) == pl.num_programs(2) - 1)
    def _():
        out = acc_ref[...] + b_ref[...]
        if relu:
            out = jnp.maximum(out, 0.0)
        o_ref[...] = out.astype(o_ref.dtype)


def fused_matmul_bias(x, w, b, *, relu=False, out_dtype=jnp.float32):
    """x:(M,K) bf16, w:(K,N) bf16, b:(N,) f32 -> (M,N) out_dtype."""
    M, K = x.shape
    Kw, N = w.shape
    assert K == Kw
    Mp, Kp, Np = _round_up(M, 8), _round_up(K, 128), _round_up(N, 128)
    if (Mp, Kp) != (M, K):
        x = jnp.pad(x, ((0, Mp - M), (0, Kp - K)))
    if (Kp, Np) != (K, N):
        w = jnp.pad(w, ((0, Kp - K), (0, Np - N)))
    b2 = jnp.pad(b.astype(jnp.float32).reshape(1, N), ((0, 0), (0, Np - N)))

    tm = _pick_tile(Mp, (512, 256, 128, 64, 32, 16, 8))
    tn = _pick_tile(Np, (512, 256, 128))
    tk = _pick_tile(Kp, (512, 256, 128))
    grid = (Mp // tm, Np // tn, Kp // tk)

    out = pl.pallas_call(
        functools.partial(_matmul_bias_kernel, relu=relu),
        out_shape=jax.ShapeDtypeStruct((Mp, Np), out_dtype),
        grid_spec=pltpu.PrefetchScalarGridSpec(
            num_scalar_prefetch=0,
            grid=grid,
            in_specs=[
                pl.BlockSpec((tm, tk), lambda i, j, k: (i, k)),
                pl.BlockSpec((tk, tn), lambda i, j, k: (k, j)),
                pl.BlockSpec((1, tn), lambda i, j, k: (0, j)),
            ],
            out_specs=pl.BlockSpec((tm, tn), lambda i, j, k: (i, j)),
            scratch_shapes=[pltpu.VMEM((tm, tn), jnp.float32)],
        ),
        compiler_params=pltpu.CompilerParams(
            dimension_semantics=("parallel", "parallel", "arbitrary")),
    )(x, w, b2)
    if (Mp, Np) != (M, N):
        out = out[:M, :N]
    return out


# ---------------------------------------------------------------------------
# Kernel 2: LSTM layer recurrence.  grid=(T,), h/c persist in VMEM scratch.
# ---------------------------------------------------------------------------
def _sigmoid(x):
    return 1.0 / (1.0 + jnp.exp(-x))


def _lstm_layer_kernel(xg_ref, whh_ref, h_out_ref, h_scr, c_scr, *, hidden):
    t = pl.program_id(0)

    @pl.when(t == 0)
    def _():  # zero initial hidden/cell state (the `None` in the PyTorch forward)
        h_scr[...] = jnp.zeros_like(h_scr)
        c_scr[...] = jnp.zeros_like(c_scr)

    # x_t @ W_ih^T + b_ih + b_hh was precomputed for all t; add the recurrent term.
    gates = xg_ref[...] + jnp.dot(h_scr[...].astype(jnp.bfloat16), whh_ref[...],
                                  preferred_element_type=jnp.float32)
    i = _sigmoid(gates[:, 0 * hidden:1 * hidden])     # PyTorch gate order: i, f, g, o
    f = _sigmoid(gates[:, 1 * hidden:2 * hidden])
    g = jnp.tanh(gates[:, 2 * hidden:3 * hidden])
    o = _sigmoid(gates[:, 3 * hidden:4 * hidden])
    c = f * c_scr[...] + i * g
    h = o * jnp.tanh(c)
    c_scr[...] = c
    h_scr[...] = h
    h_out_ref[...] = h.astype(h_out_ref.dtype)


def lstm_layer(x_gates, w_hh, hidden):
    """x_gates:(T,B,4H) f32, w_hh:(H,4H) bf16 -> per-step hidden states (T,B,H) bf16."""
    T, B, G = x_gates.shape
    return pl.pallas_call(
        functools.partial(_lstm_layer_kernel, hidden=hidden),
        out_shape=jax.ShapeDtypeStruct((T, B, hidden), jnp.bfloat16),
        grid_spec=pltpu.PrefetchScalarGridSpec(
            num_scalar_prefetch=0,
            grid=(T,),
            in_specs=[
                pl.BlockSpec((None, B, G), lambda t: (t, 0, 0)),
                pl.BlockSpec((hidden, G), lambda t: (0, 0)),
            ],
            out_specs=pl.BlockSpec((None, B, hidden), lambda t: (t, 0, 0)),
            scratch_shapes=[pltpu.VMEM((B, hidden), jnp.float32),   # h_{t-1}
                            pltpu.VMEM((B, hidden), jnp.float32)],  # c_{t-1}
        ),
        compiler_params=pltpu.CompilerParams(
            dimension_semantics=("arbitrary",)),  # true recurrence: must be sequential
    )(x_gates, w_hh)


# ---------------------------------------------------------------------------
# Kernel 3: fused classifier head  relu(h @ W1 + b1) @ W2 + b2   (single call)
# ---------------------------------------------------------------------------
def _head_kernel(h_ref, w1_ref, b1_ref, w2_ref, b2_ref, o_ref):
    z = jnp.dot(h_ref[...], w1_ref[...], preferred_element_type=jnp.float32) + b1_ref[...]
    z = jnp.maximum(z, 0.0)
    # F.dropout(p=drop_p, training=False) is an identity in eval mode.
    out = jnp.dot(z.astype(jnp.bfloat16), w2_ref[...],
                  preferred_element_type=jnp.float32) + b2_ref[...]
    o_ref[...] = out


def mlp_head(h_last, fc1, fc2, num_classes):
    B, H = h_last.shape
    FCp = fc1["w"].shape[1]
    Cp = fc2["w"].shape[1]          # classes zero-padded to a multiple of 128 at init
    out = pl.pallas_call(
        _head_kernel,
        out_shape=jax.ShapeDtypeStruct((B, Cp), jnp.float32),
        grid=(1,),
        in_specs=[
            pl.BlockSpec((B, H), lambda i: (0, 0)),
            pl.BlockSpec((H, FCp), lambda i: (0, 0)),
            pl.BlockSpec((1, FCp), lambda i: (0, 0)),
            pl.BlockSpec((FCp, Cp), lambda i: (0, 0)),
            pl.BlockSpec((1, Cp), lambda i: (0, 0)),
        ],
        out_specs=pl.BlockSpec((B, Cp), lambda i: (0, 0)),
    )(h_last, fc1["w"], fc1["b"], fc2["w"], fc2["b"])
    return out[:, :num_classes]


# ---------------------------------------------------------------------------
# Parameters (deterministic, synthetic; PyTorch-style uniform init)
# ---------------------------------------------------------------------------
def init_decoder_params(key, cnn_embed_dim=128, h_rnn_layers=3, h_rnn=128,
                        h_fc_dim=128, num_classes=39):
    keys = iter(jax.random.split(key, 4 * h_rnn_layers + 4))
    bound = h_rnn ** -0.5
    lstm = []
    in_dim = cnn_embed_dim
    for _ in range(h_rnn_layers):
        w_ih = jax.random.uniform(next(keys), (in_dim, 4 * h_rnn), jnp.float32, -bound, bound)
        w_hh = jax.random.uniform(next(keys), (h_rnn, 4 * h_rnn), jnp.float32, -bound, bound)
        b_ih = jax.random.uniform(next(keys), (4 * h_rnn,), jnp.float32, -bound, bound)
        b_hh = jax.random.uniform(next(keys), (4 * h_rnn,), jnp.float32, -bound, bound)
        lstm.append({
            "w_ih": w_ih.astype(jnp.bfloat16),   # cast once at init, not per call
            "w_hh": w_hh.astype(jnp.bfloat16),
            "bias": b_ih + b_hh,                 # biases folded together (f32)
        })
        in_dim = h_rnn

    b1 = h_rnn ** -0.5
    fc1_w = jax.random.uniform(next(keys), (h_rnn, h_fc_dim), jnp.float32, -b1, b1)
    fc1_b = jax.random.uniform(next(keys), (h_fc_dim,), jnp.float32, -b1, b1)
    b2 = h_fc_dim ** -0.5
    c_pad = _round_up(num_classes, 128)
    fc2_w = jax.random.uniform(next(keys), (h_fc_dim, num_classes), jnp.float32, -b2, b2)
    fc2_b = jax.random.uniform(next(keys), (num_classes,), jnp.float32, -b2, b2)
    fc2_w = jnp.pad(fc2_w, ((0, 0), (0, c_pad - num_classes)))   # lane-dense output store
    fc2_b = jnp.pad(fc2_b, ((0, c_pad - num_classes),))

    return {
        "lstm": lstm,
        "fc1": {"w": fc1_w.astype(jnp.bfloat16), "b": fc1_b.reshape(1, -1)},
        "fc2": {"w": fc2_w.astype(jnp.bfloat16), "b": fc2_b.reshape(1, -1)},
        "hidden": h_rnn,
        "num_classes": num_classes,
    }


# ---------------------------------------------------------------------------
# DecoderRNN forward (eval mode)
# ---------------------------------------------------------------------------
def decoder_rnn_forward(params, x_rnn):
    """x_rnn: (B, T, CNN_embed_dim) batch-first -> logits (B, num_classes)."""
    B, T, _ = x_rnn.shape
    H = params["hidden"]
    # self.LSTM.flatten_parameters() is a cuDNN-layout no-op.
    # batch-first -> time-major so each recurrence grid step reads one contiguous (B, 4H) slab.
    x = jnp.transpose(x_rnn, (1, 0, 2)).astype(jnp.bfloat16)            # (T, B, D)
    for lp in params["lstm"]:
        # input->gates projection for ALL timesteps at once: one tiled MXU matmul.
        xg = fused_matmul_bias(x.reshape(T * B, -1), lp["w_ih"], lp["bias"])
        x = lstm_layer(xg.reshape(T, B, 4 * H), lp["w_hh"], H)          # (T, B, H) bf16
    h_last = x[T - 1]                                                    # == RNN_out[:, -1, :]
    return mlp_head(h_last, params["fc1"], params["fc2"], params["num_classes"])


# ---------------------------------------------------------------------------
if __name__ == "__main__":
    key = jax.random.PRNGKey(0)
    k_param, k_data = jax.random.split(key)

    # Small, TPU-friendly shapes consistent with the module (hidden dims multiples of 128).
    B, T = 8, 8
    CNN_embed_dim, h_RNN_layers, h_RNN, h_FC_dim, num_classes = 128, 3, 128, 128, 39

    params = init_decoder_params(k_param, CNN_embed_dim, h_RNN_layers, h_RNN,
                                 h_FC_dim, num_classes)
    x_rnn = jax.random.normal(k_data, (B, T, CNN_embed_dim), jnp.float32)

    fwd = jax.jit(functools.partial(decoder_rnn_forward, params))
    logits = jax.block_until_ready(fwd(x_rnn))
    assert logits.shape == (B, num_classes), logits.shape
    print("KERNEL_OK")
</pallas_src>

<mosaic_0001>
module attributes {stable_mosaic.version = 11 : i64} {
  func.func @_matmul_bias_kernel(%arg0: i32, %arg1: i32, %arg2: i32, %arg3: memref<64x128xbf16, #tpu.memory_space<vmem>>, %arg4: memref<128x512xbf16, #tpu.memory_space<vmem>>, %arg5: memref<1x512xf32, #tpu.memory_space<vmem>>, %arg6: memref<64x512xf32, #tpu.memory_space<vmem>>, %arg7: memref<64x512xf32, #tpu.memory_space<vmem>>) attributes {dimension_semantics = [#tpu.dimension_semantics<parallel>, #tpu.dimension_semantics<parallel>, #tpu.dimension_semantics<arbitrary>], iteration_bounds = array<i64: 1, 1, 1>, scalar_prefetch = 0 : i64, scratch_operands = 1 : i64, tpu.core_type = #tpu.core_type<tc>, window_params = [{transform_indices = @transform_0, window_bounds = array<i64: 64, 128>}, {transform_indices = @transform_1, window_bounds = array<i64: 128, 512>}, {transform_indices = @transform_2, window_bounds = array<i64: 1, 512>}, {transform_indices = @transform_3, window_bounds = array<i64: 64, 512>}]} {
    %c0_i32 = arith.constant 0 : i32
    %0 = arith.cmpi eq, %arg2, %c0_i32 : i32
    %1 = arith.extui %0 : i1 to i32
    %c0_i32_0 = arith.constant 0 : i32
    %2 = arith.cmpi ne, %1, %c0_i32_0 : i32
    scf.if %2 {
      %cst_10 = arith.constant 0.000000e+00 : f32
      %12 = vector.broadcast %cst_10 : f32 to vector<64x512xf32>
      %c0_11 = arith.constant 0 : index
      %c0_12 = arith.constant 0 : index
      %13 = vector.load %arg7[%c0_11, %c0_12] : memref<64x512xf32, #tpu.memory_space<vmem>>, vector<64x512xf32>
      tpu.vector_store %arg7[%c0_11, %c0_12], %12 {strides = array<i32>} : memref<64x512xf32, #tpu.memory_space<vmem>>, vector<64x512xf32>,
    } else {
    }
    %c0 = arith.constant 0 : index
    %c0_1 = arith.constant 0 : index
    %3 = vector.load %arg7[%c0, %c0_1] : memref<64x512xf32, #tpu.memory_space<vmem>>, vector<64x512xf32>
    %c0_2 = arith.constant 0 : index
    %c0_3 = arith.constant 0 : index
    %4 = vector.load %arg3[%c0_2, %c0_3] : memref<64x128xbf16, #tpu.memory_space<vmem>>, vector<64x128xbf16>
    %c0_4 = arith.constant 0 : index
    %c0_5 = arith.constant 0 : index
    %5 = vector.load %arg4[%c0_4, %c0_5] : memref<128x512xbf16, #tpu.memory_space<vmem>>, vector<128x512xbf16>
    %cst = arith.constant dense<0.000000e+00> : vector<64x512xf32>
    %6 = tpu.matmul %4, %5, %cst {dimension_numbers = #tpu.dot_dimension_numbers<[1], [0], [0], [1], [0, 0, 1, 1], [], []>} : vector<64x128xbf16>, vector<128x512xbf16>, vector<64x512xf32> -> vector<64x512xf32>
    %7 = arith.addf %3, %6 : vector<64x512xf32>
    %c0_6 = arith.constant 0 : index
    %c0_7 = arith.constant 0 : index
    %8 = vector.load %arg7[%c0_6, %c0_7] : memref<64x512xf32, #tpu.memory_space<vmem>>, vector<64x512xf32>
    tpu.vector_store %arg7[%c0_6, %c0_7], %7 {strides = array<i32>} : memref<64x512xf32, #tpu.memory_space<vmem>>, vector<64x512xf32>,
    %c0_i32_8 = arith.constant 0 : i32
    %9 = arith.cmpi eq, %arg2, %c0_i32_8 : i32
    %10 = arith.extui %9 : i1 to i32
    %c0_i32_9 = arith.constant 0 : i32
    %11 = arith.cmpi ne, %10, %c0_i32_9 : i32
    scf.if %11 {
      %c0_10 = arith.constant 0 : index
      %c0_11 = arith.constant 0 : index
      %12 = vector.load %arg7[%c0_10, %c0_11] : memref<64x512xf32, #tpu.memory_space<vmem>>, vector<64x512xf32>
      %c0_12 = arith.constant 0 : index
      %c0_13 = arith.constant 0 : index
      %13 = vector.load %arg5[%c0_12, %c0_13] : memref<1x512xf32, #tpu.memory_space<vmem>>, vector<1x512xf32>
      %14 = vector.broadcast %13 : vector<1x512xf32> to vector<64x512xf32>
      %15 = arith.addf %12, %14 : vector<64x512xf32>
      %c0_14 = arith.constant 0 : index
      %c0_15 = arith.constant 0 : index
      %16 = vector.load %arg6[%c0_14, %c0_15] : memref<64x512xf32, #tpu.memory_space<vmem>>, vector<64x512xf32>
      tpu.vector_store %arg6[%c0_14, %c0_15], %15 {strides = array<i32>} : memref<64x512xf32, #tpu.memory_space<vmem>>, vector<64x512xf32>,
    } else {
    }
    return
  }
  func.func @transform_0(%arg0: i32, %arg1: i32, %arg2: i32) -> (i32, i32) {
    %c0_i32 = arith.constant 0 : i32
    return %arg0, %arg2 : i32, i32
  }
  func.func @transform_1(%arg0: i32, %arg1: i32, %arg2: i32) -> (i32, i32) {
    %c0_i32 = arith.constant 0 : i32
    return %arg2, %arg1 : i32, i32
  }
  func.func @transform_2(%arg0: i32, %arg1: i32, %arg2: i32) -> (i32, i32) {
    %c0_i32 = arith.constant 0 : i32
    %c0_i32_0 = arith.constant 0 : i32
    return %c0_i32, %arg1 : i32, i32
  }
  func.func @transform_3(%arg0: i32, %arg1: i32, %arg2: i32) -> (i32, i32) {
    %c0_i32 = arith.constant 0 : i32
    return %arg0, %arg1 : i32, i32
  }
}

module attributes {stable_mosaic.version = 11 : i64} {
  func.func @_head_kernel(%arg0: i32, %arg1: memref<8x128xbf16, #tpu.memory_space<vmem>>, %arg2: memref<128x128xbf16, #tpu.memory_space<vmem>>, %arg3: memref<1x128xf32, #tpu.memory_space<vmem>>, %arg4: memref<128x128xbf16, #tpu.memory_space<vmem>>, %arg5: memref<1x128xf32, #tpu.memory_space<vmem>>, %arg6: memref<8x128xf32, #tpu.memory_space<vmem>>) attributes {dimension_semantics = [#tpu.dimension_semantics<arbitrary>], iteration_bounds = array<i64: 1>, scalar_prefetch = 0 : i64, scratch_operands = 0 : i64, tpu.core_type = #tpu.core_type<tc>, window_params = [{pipeline_mode = #tpu.pipeline_mode<synchronous>, transform_indices = @transform_0, window_bounds = array<i64: 8, 128>}, {pipeline_mode = #tpu.pipeline_mode<synchronous>, transform_indices = @transform_1, window_bounds = array<i64: 128, 128>}, {pipeline_mode = #tpu.pipeline_mode<synchronous>, transform_indices = @transform_2, window_bounds = array<i64: 1, 128>}, {pipeline_mode = #tpu.pipeline_mode<synchronous>, transform_indices = @transform_3, window_bounds = array<i64: 128, 128>}, {pipeline_mode = #tpu.pipeline_mode<synchronous>, transform_indices = @transform_4, window_bounds = array<i64: 1, 128>}, {pipeline_mode = #tpu.pipeline_mode<synchronous>, transform_indices = @transform_5, window_bounds = array<i64: 8, 128>}]} {
    %c0 = arith.constant 0 : index
    %c0_0 = arith.constant 0 : index
    %0 = vector.load %arg1[%c0, %c0_0] : memref<8x128xbf16, #tpu.memory_space<vmem>>, vector<8x128xbf16>
    %c0_1 = arith.constant 0 : index
    %c0_2 = arith.constant 0 : index
    %1 = vector.load %arg2[%c0_1, %c0_2] : memref<128x128xbf16, #tpu.memory_space<vmem>>, vector<128x128xbf16>
    %cst = arith.constant dense<0.000000e+00> : vector<8x128xf32>
    %2 = tpu.matmul %0, %1, %cst {dimension_numbers = #tpu.dot_dimension_numbers<[1], [0], [0], [1], [0, 0, 1, 1], [], []>} : vector<8x128xbf16>, vector<128x128xbf16>, vector<8x128xf32> -> vector<8x128xf32>
    %c0_3 = arith.constant 0 : index
    %c0_4 = arith.constant 0 : index
    %3 = vector.load %arg3[%c0_3, %c0_4] : memref<1x128xf32, #tpu.memory_space<vmem>>, vector<1x128xf32>
    %4 = vector.broadcast %3 : vector<1x128xf32> to vector<8x128xf32>
    %5 = arith.addf %2, %4 : vector<8x128xf32>
    %cst_5 = arith.constant 0.000000e+00 : f32
    %6 = vector.broadcast %cst_5 : f32 to vector<8x128xf32>
    %7 = arith.maximumf %5, %6 : vector<8x128xf32>
    %8 = arith.truncf %7 : vector<8x128xf32> to vector<8x128xbf16>
    %c0_6 = arith.constant 0 : index
    %c0_7 = arith.constant 0 : index
    %9 = vector.load %arg4[%c0_6, %c0_7] : memref<128x128xbf16, #tpu.memory_space<vmem>>, vector<128x128xbf16>
    %cst_8 = arith.constant dense<0.000000e+00> : vector<8x128xf32>
    %10 = tpu.matmul %8, %9, %cst_8 {dimension_numbers = #tpu.dot_dimension_numbers<[1], [0], [0], [1], [0, 0, 1, 1], [], []>} : vector<8x128xbf16>, vector<128x128xbf16>, vector<8x128xf32> -> vector<8x128xf32>
    %c0_9 = arith.constant 0 : index
    %c0_10 = arith.constant 0 : index
    %11 = vector.load %arg5[%c0_9, %c0_10] : memref<1x128xf32, #tpu.memory_space<vmem>>, vector<1x128xf32>
    %12 = vector.broadcast %11 : vector<1x128xf32> to vector<8x128xf32>
    %13 = arith.addf %10, %12 : vector<8x128xf32>
    %c0_11 = arith.constant 0 : index
    %c0_12 = arith.constant 0 : index
    %14 = vector.load %arg6[%c0_11, %c0_12] : memref<8x128xf32, #tpu.memory_space<vmem>>, vector<8x128xf32>
    tpu.vector_store %arg6[%c0_11, %c0_12], %13 {strides = array<i32>} : memref<8x128xf32, #tpu.memory_space<vmem>>, vector<8x128xf32>,
    return
  }
  func.func @transform_0(%arg0: i32) -> (i32, i32) {
    %c0_i32 = arith.constant 0 : i32
    %c0_i32_0 = arith.constant 0 : i32
    %c0_i32_1 = arith.constant 0 : i32
    return %c0_i32, %c0_i32_0 : i32, i32
  }
  func.func @transform_1(%arg0: i32) -> (i32, i32) {
    %c0_i32 = arith.constant 0 : i32
    %c0_i32_0 = arith.constant 0 : i32
    %c0_i32_1 = arith.constant 0 : i32
    return %c0_i32, %c0_i32_0 : i32, i32
  }
  func.func @transform_2(%arg0: i32) -> (i32, i32) {
    %c0_i32 = arith.constant 0 : i32
    %c0_i32_0 = arith.constant 0 : i32
    %c0_i32_1 = arith.constant 0 : i32
    return %c0_i32, %c0_i32_0 : i32, i32
  }
  func.func @transform_3(%arg0: i32) -> (i32, i32) {
    %c0_i32 = arith.constant 0 : i32
    %c0_i32_0 = arith.constant 0 : i32
    %c0_i32_1 = arith.constant 0 : i32
    return %c0_i32, %c0_i32_0 : i32, i32
  }
  func.func @transform_4(%arg0: i32) -> (i32, i32) {
    %c0_i32 = arith.constant 0 : i32
    %c0_i32_0 = arith.constant 0 : i32
    %c0_i32_1 = arith.constant 0 : i32
    return %c0_i32, %c0_i32_0 : i32, i32
  }
  func.func @transform_5(%arg0: i32) -> (i32, i32) {
    %c0_i32 = arith.constant 0 : i32
    %c0_i32_0 = arith.constant 0 : i32
    %c0_i32_1 = arith.constant 0 : i32
    return %c0_i32, %c0_i32_0 : i32, i32
  }
}

module attributes {stable_mosaic.version = 11 : i64} {
  func.func @_lstm_layer_kernel(%arg0: i32, %arg1: memref<1x8x512xf32, #tpu.memory_space<vmem>>, %arg2: memref<128x512xbf16, #tpu.memory_space<vmem>>, %arg3: memref<1x8x128xbf16, #tpu.memory_space<vmem>>, %arg4: memref<8x128xf32, #tpu.memory_space<vmem>>, %arg5: memref<8x128xf32, #tpu.memory_space<vmem>>) attributes {dimension_semantics = [#tpu.dimension_semantics<arbitrary>], iteration_bounds = array<i64: 8>, scalar_prefetch = 0 : i64, scratch_operands = 2 : i64, tpu.core_type = #tpu.core_type<tc>, window_params = [{transform_indices = @transform_0, window_bounds = array<i64: 1, 8, 512>}, {pipeline_mode = #tpu.pipeline_mode<synchronous>, transform_indices = @transform_1, window_bounds = array<i64: 128, 512>}, {transform_indices = @transform_2, window_bounds = array<i64: 1, 8, 128>}]} {
    %c0_i32 = arith.constant 0 : i32
    %0 = arith.cmpi eq, %arg0, %c0_i32 : i32
    %1 = arith.extui %0 : i1 to i32
    %c0_i32_0 = arith.constant 0 : i32
    %2 = arith.cmpi ne, %1, %c0_i32_0 : i32
    scf.if %2 {
      %cst_25 = arith.constant 0.000000e+00 : f32
      %48 = vector.broadcast %cst_25 : f32 to vector<8x128xf32>
      %c0_26 = arith.constant 0 : index
      %c0_27 = arith.constant 0 : index
      %49 = vector.load %arg4[%c0_26, %c0_27] : memref<8x128xf32, #tpu.memory_space<vmem>>, vector<8x128xf32>
      tpu.vector_store %arg4[%c0_26, %c0_27], %48 {strides = array<i32>} : memref<8x128xf32, #tpu.memory_space<vmem>>, vector<8x128xf32>,
      %cst_28 = arith.constant 0.000000e+00 : f32
      %50 = vector.broadcast %cst_28 : f32 to vector<8x128xf32>
      %c0_29 = arith.constant 0 : index
      %c0_30 = arith.constant 0 : index
      %51 = vector.load %arg5[%c0_29, %c0_30] : memref<8x128xf32, #tpu.memory_space<vmem>>, vector<8x128xf32>
      tpu.vector_store %arg5[%c0_29, %c0_30], %50 {strides = array<i32>} : memref<8x128xf32, #tpu.memory_space<vmem>>, vector<8x128xf32>,
    } else {
    }
    %c0 = arith.constant 0 : index
    %c0_1 = arith.constant 0 : index
    %c0_2 = arith.constant 0 : index
    %3 = vector.load %arg1[%c0, %c0_1, %c0_2] : memref<1x8x512xf32, #tpu.memory_space<vmem>>, vector<1x8x512xf32>
    %4 = vector.shape_cast %3 : vector<1x8x512xf32> to vector<8x512xf32>
    %c0_3 = arith.constant 0 : index
    %c0_4 = arith.constant 0 : index
    %5 = vector.load %arg4[%c0_3, %c0_4] : memref<8x128xf32, #tpu.memory_space<vmem>>, vector<8x128xf32>
    %6 = arith.truncf %5 : vector<8x128xf32> to vector<8x128xbf16>
    %c0_5 = arith.constant 0 : index
    %c0_6 = arith.constant 0 : index
    %7 = vector.load %arg2[%c0_5, %c0_6] : memref<128x512xbf16, #tpu.memory_space<vmem>>, vector<128x512xbf16>
    %cst = arith.constant dense<0.000000e+00> : vector<8x512xf32>
    %8 = tpu.matmul %6, %7, %cst {dimension_numbers = #tpu.dot_dimension_numbers<[1], [0], [0], [1], [0, 0, 1, 1], [], []>} : vector<8x128xbf16>, vector<128x512xbf16>, vector<8x512xf32> -> vector<8x512xf32>
    %9 = arith.addf %4, %8 : vector<8x512xf32>
    %10 = vector.extract_strided_slice %9 {offsets = [0, 0], sizes = [8, 128], strides = [1, 1]} : vector<8x512xf32> to vector<8x128xf32>
    %cst_7 = arith.constant 0.000000e+00 : f32
    %11 = vector.broadcast %cst_7 : f32 to vector<8x128xf32>
    %12 = arith.subf %11, %10 : vector<8x128xf32>
    %13 = math.exp %12 : vector<8x128xf32>
    %cst_8 = arith.constant 1.000000e+00 : f32
    %14 = vector.broadcast %cst_8 : f32 to vector<8x128xf32>
    %15 = arith.addf %14, %13 : vector<8x128xf32>
    %cst_9 = arith.constant 1.000000e+00 : f32
    %16 = vector.broadcast %cst_9 : f32 to vector<8x128xf32>
    %17 = arith.divf %16, %15 : vector<8x128xf32>
    %18 = vector.extract_strided_slice %9 {offsets = [0, 128], sizes = [8, 128], strides = [1, 1]} : vector<8x512xf32> to vector<8x128xf32>
    %cst_10 = arith.constant 0.000000e+00 : f32
    %19 = vector.broadcast %cst_10 : f32 to vector<8x128xf32>
    %20 = arith.subf %19, %18 : vector<8x128xf32>
    %21 = math.exp %20 : vector<8x128xf32>
    %cst_11 = arith.constant 1.000000e+00 : f32
    %22 = vector.broadcast %cst_11 : f32 to vector<8x128xf32>
    %23 = arith.addf %22, %21 : vector<8x128xf32>
    %cst_12 = arith.constant 1.000000e+00 : f32
    %24 = vector.broadcast %cst_12 : f32 to vector<8x128xf32>
    %25 = arith.divf %24, %23 : vector<8x128xf32>
    %26 = vector.extract_strided_slice %9 {offsets = [0, 256], sizes = [8, 128], strides = [1, 1]} : vector<8x512xf32> to vector<8x128xf32>
    %27 = math.tanh %26 : vector<8x128xf32>
    %28 = vector.extract_strided_slice %9 {offsets = [0, 384], sizes = [8, 128], strides = [1, 1]} : vector<8x512xf32> to vector<8x128xf32>
    %cst_13 = arith.constant 0.000000e+00 : f32
    %29 = vector.broadcast %cst_13 : f32 to vector<8x128xf32>
    %30 = arith.subf %29, %28 : vector<8x128xf32>
    %31 = math.exp %30 : vector<8x128xf32>
    %cst_14 = arith.constant 1.000000e+00 : f32
    %32 = vector.broadcast %cst_14 : f32 to vector<8x128xf32>
    %33 = arith.addf %32, %31 : vector<8x128xf32>
    %cst_15 = arith.constant 1.000000e+00 : f32
    %34 = vector.broadcast %cst_15 : f32 to vector<8x128xf32>
    %35 = arith.divf %34, %33 : vector<8x128xf32>
    %c0_16 = arith.constant 0 : index
    %c0_17 = arith.constant 0 : index
    %36 = vector.load %arg5[%c0_16, %c0_17] : memref<8x128xf32, #tpu.memory_space<vmem>>, vector<8x128xf32>
    %37 = arith.mulf %25, %36 : vector<8x128xf32>
    %38 = arith.mulf %17, %27 : vector<8x128xf32>
    %39 = arith.addf %37, %38 : vector<8x128xf32>
    %40 = math.tanh %39 : vector<8x128xf32>
    %41 = arith.mulf %35, %40 : vector<8x128xf32>
    %c0_18 = arith.constant 0 : index
    %c0_19 = arith.constant 0 : index
    %42 = vector.load %arg5[%c0_18, %c0_19] : memref<8x128xf32, #tpu.memory_space<vmem>>, vector<8x128xf32>
    tpu.vector_store %arg5[%c0_18, %c0_19], %39 {strides = array<i32>} : memref<8x128xf32, #tpu.memory_space<vmem>>, vector<8x128xf32>,
    %c0_20 = arith.constant 0 : index
    %c0_21 = arith.constant 0 : index
    %43 = vector.load %arg4[%c0_20, %c0_21] : memref<8x128xf32, #tpu.memory_space<vmem>>, vector<8x128xf32>
    tpu.vector_store %arg4[%c0_20, %c0_21], %41 {strides = array<i32>} : memref<8x128xf32, #tpu.memory_space<vmem>>, vector<8x128xf32>,
    %44 = arith.truncf %41 : vector<8x128xf32> to vector<8x128xbf16>
    %c0_22 = arith.constant 0 : index
    %c0_23 = arith.constant 0 : index
    %c0_24 = arith.constant 0 : index
    %45 = vector.load %arg3[%c0_22, %c0_23, %c0_24] : memref<1x8x128xbf16, #tpu.memory_space<vmem>>, vector<1x8x128xbf16>
    %46 = vector.shape_cast %45 : vector<1x8x128xbf16> to vector<8x128xbf16>
    %47 = vector.shape_cast %44 : vector<8x128xbf16> to vector<1x8x128xbf16>
    tpu.vector_store %arg3[%c0_22, %c0_23, %c0_24], %47 {strides = array<i32>} : memref<1x8x128xbf16, #tpu.memory_space<vmem>>, vector<1x8x128xbf16>,
    return
  }
  func.func @transform_0(%arg0: i32) -> (i32, i32, i32) {
    %c0_i32 = arith.constant 0 : i32
    %c0_i32_0 = arith.constant 0 : i32
    %c0_i32_1 = arith.constant 0 : i32
    return %arg0, %c0_i32, %c0_i32_0 : i32, i32, i32
  }
  func.func @transform_1(%arg0: i32) -> (i32, i32) {
    %c0_i32 = arith.constant 0 : i32
    %c0_i32_0 = arith.constant 0 : i32
    %c0_i32_1 = arith.constant 0 : i32
    return %c0_i32, %c0_i32_0 : i32, i32
  }
  func.func @transform_2(%arg0: i32) -> (i32, i32, i32) {
    %c0_i32 = arith.constant 0 : i32
    %c0_i32_0 = arith.constant 0 : i32
    %c0_i32_1 = arith.constant 0 : i32
    return %arg0, %c0_i32, %c0_i32_0 : i32, i32, i32
  }
}

</mosaic_0001>

<llo_original>
// kernel: decoder_rnn_forward.8
$region0: #{decoder_rnn_forward.8}
  #allocation0 [shape = 'u32[]', space=smem, size = 0x4, offset = 0x4, fixed_abs, tag = 'smem constant byte address 0x4 - core index']
  #allocation1 [shape = 'u32[144,128]{1,0:T(1,128)}', space=vmem, size = 0x12000, scoped, tag = 'internal scratch']
  #allocation2 [shape = 'f32[8,128]{1,0:T(8,128)}', space=vmem, size = 0x1000, scoped, tag = 'scratch operand']
  #allocation3 [shape = 'f32[8,128]{1,0:T(8,128)}', space=vmem, size = 0x1000, scoped, tag = 'scratch operand']
  %s0 = inlined_call_operand.vmem [shape: f32[8,8,512], index: 0, kind: input, shape index: {}]
  %s1 = inlined_call_operand.vmem [shape: bf16[128,512], index: 1, kind: input, shape index: {}]
  %s2 = inlined_call_operand.vmem [shape: bf16[8,8,128], index: 2, kind: output, shape index: {}]
  %s3 = sld [smem:[#allocation0]]
  $region45: #{decoder_rnn_forward.8} parent=0
    _
  %s5 = ssub.s32 1, %s3
  %s6 = scalar_select 0, %s5, %s3
  loop: start=0, step=1, limit=10
  $region2: #{decoder_rnn_forward.8} parent=0 // loop_pre_header
    _
  $region3: #{decoder_rnn_forward.8} parent=0 // loop_header
    %s8 = sphi 0, %s12
    %p9 = scmp.ge.s32.totalorder %s8, 10
    %s18 = sphi 0, %s20
    %s21 = sphi 0, %s18
    %s22 = sphi 0, %s21
    %s38 = sphi 0, %s22
    %s42 = sphi 0, %s42
    %s44 = sphi 0, %s42
    %s45 = sphi 0, %s44
    %s59 = sphi 0, %s45
    %s65 = sphi 0, %s67
    %s68 = sphi 0, %s65
    %s69 = sphi 0, %s68
    %s85 = sphi 0, %s69
  $region4: #{decoder_rnn_forward.8} parent=0 // loop_header_branch
    %11 = sbr.rel (%p9) target = $region8
  $region5: #{decoder_rnn_forward.8} parent=0 // loop_body
    %s13 = ssub.s32 %s8, 1
    %s14 = ssub.s32 %s8, 2
    %s15 = sadd.s32 %s8, 1
    %s16 = ssub.s32 %s8, %s15
    %p17 = scmp.eq.s32.totalorder %s16, 0
    %s19 = sadd.s32 %s18, 1
    %s20 = scalar_select %p17, %s18, %s19
    %p23 = pneg %p17
    %p24 = scmp.eq.s32.totalorder %s8, 7
    %p25 = por %p23, %p24
    %p26 = scmp.ne.s32.totalorder %s18, %s21
    %p27 = scmp.eq.s32.totalorder %s8, 0
    %p28 = por %p26, %p27
    %p29 = scmp.ne.s32.totalorder %s18, %s21
    %p30 = scmp.eq.s32.totalorder %s13, 7
    %p31 = por %p29, %p30
    %p32 = scmp.ne.s32.totalorder %s21, %s22
    %p33 = scmp.eq.s32.totalorder %s13, 0
    %p34 = por %p32, %p33
    %p35 = scmp.ne.s32.totalorder %s21, %s22
    %p36 = scmp.eq.s32.totalorder %s14, 7
    %p37 = por %p35, %p36
    %p39 = scmp.ne.s32.totalorder %s22, %s38
    %p40 = scmp.eq.s32.totalorder %s14, 0
    %p41 = por %p39, %p40
    %s43 = sadd.s32 %s42, 1
    %p46 = scmp.eq.s32.totalorder %s8, 7
    %p47 = scmp.ne.s32.totalorder %s42, %s44
    %p48 = scmp.eq.s32.totalorder %s8, 0
    %p49 = por %p47, %p48
    %p50 = scmp.ne.s32.totalorder %s42, %s44
    %p51 = scmp.eq.s32.totalorder %s13, 7
    %p52 = por %p50, %p51
    %p53 = scmp.ne.s32.totalorder %s44, %s45
    %p54 = scmp.eq.s32.totalorder %s13, 0
    %p55 = por %p53, %p54
    %p56 = scmp.ne.s32.totalorder %s44, %s45
    %p57 = scmp.eq.s32.totalorder %s14, 7
    %p58 = por %p56, %p57
    %p60 = scmp.ne.s32.totalorder %s45, %s59
    %p61 = scmp.eq.s32.totalorder %s14, 0
    %p62 = por %p60, %p61
    %s63 = ssub.s32 %s8, %s15
    %p64 = scmp.eq.s32.totalorder %s63, 0
    %s66 = sadd.s32 %s65, 1
    %s67 = scalar_select %p64, %s65, %s66
    %p70 = pneg %p64
    %p71 = scmp.eq.s32.totalorder %s8, 7
    %p72 = por %p70, %p71
    %p73 = scmp.ne.s32.totalorder %s65, %s68
    %p74 = scmp.eq.s32.totalorder %s8, 0
    %p75 = por %p73, %p74
    %p76 = scmp.ne.s32.totalorder %s65, %s68
    %p77 = scmp.eq.s32.totalorder %s13, 7
    %p78 = por %p76, %p77
    %p79 = scmp.ne.s32.totalorder %s68, %s69
    %p80 = scmp.eq.s32.totalorder %s13, 0
    %p81 = por %p79, %p80
    %p82 = scmp.ne.s32.totalorder %s68, %s69
    %p83 = scmp.eq.s32.totalorder %s14, 7
    %p84 = por %p82, %p83
    %p86 = scmp.ne.s32.totalorder %s69, %s85
    %p87 = scmp.eq.s32.totalorder %s14, 0
    %p88 = por %p86, %p87
    %p89 = scmp.le.s32.totalorder 1, %s8
    %p90 = scmp.lt.s32.totalorder %s8, 9
    %p91 = pnand %p89, %p90
    %p92 = pneg %p91
    // Predicated region
    $region9: #{decoder_rnn_forward.8} parent=5 // pred_check
      _
    $region10: #{decoder_rnn_forward.8} parent=5 // pred_check_branch
      %94 = sbr.rel (%p91) target = $region12
    $region11: #{decoder_rnn_forward.8} parent=5 // pred_region
      %s95 = ssub.s32 %s8, 1
      // Predicated region
      $region13: #{decoder_rnn_forward.8} parent=11 // pred_check
        %p96 = pneg %p55
      $region14: #{decoder_rnn_forward.8} parent=11 // pred_check_branch
        %98 = sbr.rel (%p96) target = $region16
      $region15: #{decoder_rnn_forward.8} parent=11 // pred_region
        _
      $region16: #{decoder_rnn_forward.8} parent=11 // pred_fallthru
        _
    $region12: #{decoder_rnn_forward.8} parent=5 // pred_fallthru
      _
    %p99 = scmp.lt.s32.totalorder %s8, 8
    // Predicated region
    $region17: #{decoder_rnn_forward.8} parent=5 // pred_check
      %p100 = pneg %p99
    $region18: #{decoder_rnn_forward.8} parent=5 // pred_check_branch
      %102 = sbr.rel (%p100) target = $region20
    $region19: #{decoder_rnn_forward.8} parent=5 // pred_region
      // Predicated region
      $region21: #{decoder_rnn_forward.8} parent=19 // pred_check
        %p103 = pneg %p28
      $region22: #{decoder_rnn_forward.8} parent=19 // pred_check_branch
        %105 = sbr.rel (%p103) target = $region24
      $region23: #{decoder_rnn_forward.8} parent=19 // pred_region
        %p106 = scmp.lt.s32.totalorder %s8, 7
        %s107 = scalar_select %p106, %s8, 7
        %s108 = smul.addr %s107, 4
        %s109 = smul.addr %s108, 8
        %s110 = scalar_lea.vmem %s0, %s109
      $region24: #{decoder_rnn_forward.8} parent=19 // pred_fallthru
        _
    $region20: #{decoder_rnn_forward.8} parent=5 // pred_fallthru
      _
    %p111 = scmp.le.s32.totalorder 1, %s8
    %p112 = scmp.lt.s32.totalorder %s8, 9
    %p113 = pnand %p111, %p112
    %p114 = pneg %p113
    // Predicated region
    $region25: #{decoder_rnn_forward.8} parent=5 // pred_check
      _
    $region26: #{decoder_rnn_forward.8} parent=5 // pred_check_branch
      %116 = sbr.rel (%p113) target = $region28
    $region27: #{decoder_rnn_forward.8} parent=5 // pred_region
      %s117 = ssub.s32 %s8, 1
      %p118 = scmp.lt.s32.totalorder %s13, 7
      %s119 = scalar_select %p118, %s13, 7
      %s120 = smul.addr %s119, 4
      %s121 = smul.addr %s120, 8
      %s122 = scalar_lea.vmem %s0, %s121
      %p123 = pneg %p34
      %p124 = pneg %p31
      %p125 = pneg %p55
      %p126 = pneg %p52
      %p127 = pneg %p81
      %p128 = pneg %p78
      %p129 = scmp.lt.s32.totalorder %s13, 7
      %s130 = scalar_select %p129, %s13, 7
      %s131 = smul.addr %s130, 4
      %s132 = scalar_lea.vmem %s2, %s131
      %p133 = scmp.lt.s32.totalorder %s13, 7
      %s134 = scalar_select %p133, %s13, 7
      %s135 = smul.addr %s134, 4
      %s136 = smul.addr %s135, 8
      %s137 = scalar_lea.vmem %s0, %s136
      %p138 = scmp.lt.s32.totalorder %s13, 7
      %s139 = scalar_select %p138, %s13, 7
      %s140 = smul.addr %s139, 4
      %s141 = scalar_lea.vmem %s2, %s140
      %p143 = scmp.eq.s32.totalorder %s13, 0
      // Predicated region
      $region29: #{decoder_rnn_forward.8} parent=27 // pred_check
        %p144 = pneg %p143
      $region30: #{decoder_rnn_forward.8} parent=27 // pred_check_branch
        %146 = sbr.rel (%p144) target = $region32
      $region31: #{decoder_rnn_forward.8} parent=27 // pred_region
        %147 = vst [vmem:[#allocation2] sm:$0xff] 0.0
        %148 = vst [vmem:[#allocation3] sm:$0xff] 0.0
      $region32: #{decoder_rnn_forward.8} parent=27 // pred_fallthru
        _
      %v149 = vld [vmem:[%s137] sm:$0xff]
      %v150 = vld [vmem:[%s137 + $0x8] sm:$0xff]
      %v151 = vld [vmem:[%s137 + $0x10] sm:$0xff]
      %v152 = vld [vmem:[%s137 + $0x18] sm:$0xff]
      %v153 = vld [vmem:[#allocation2] sm:$0xff]
      %v154 = vpack.c.bf16 %v153, %v153
      %v155 = vld [vmem:[%s1] sm:$0xff]
      %v156 = vld [vmem:[%s1 + $0x8] sm:$0xff]
      %v157 = vld [vmem:[%s1 + $0x10] sm:$0xff]
      %v158 = vld [vmem:[%s1 + $0x18] sm:$0xff]
      %v159 = vld [vmem:[%s1 + $0x20] sm:$0xff]
      %v160 = vld [vmem:[%s1 + $0x28] sm:$0xff]
      %v161 = vld [vmem:[%s1 + $0x30] sm:$0xff]
      %v162 = vld [vmem:[%s1 + $0x38] sm:$0xff]
      %v163 = vld [vmem:[%s1 + $0x40] sm:$0xff]
      %v164 = vld [vmem:[%s1 + $0x48] sm:$0xff]
      %v165 = vld [vmem:[%s1 + $0x50] sm:$0xff]
      %v166 = vld [vmem:[%s1 + $0x58] sm:$0xff]
      %v167 = vld [vmem:[%s1 + $0x60] sm:$0xff]
      %v168 = vld [vmem:[%s1 + $0x68] sm:$0xff]
      %v169 = vld [vmem:[%s1 + $0x70] sm:$0xff]
      %v170 = vld [vmem:[%s1 + $0x78] sm:$0xff]
      %v171 = vld [vmem:[%s1 + $0x80] sm:$0xff]
      %v172 = vld [vmem:[%s1 + $0x88] sm:$0xff]
      %v173 = vld [vmem:[%s1 + $0x90] sm:$0xff]
      %v174 = vld [vmem:[%s1 + $0x98] sm:$0xff]
      %v175 = vld [vmem:[%s1 + $0xa0] sm:$0xff]
      %v176 = vld [vmem:[%s1 + $0xa8] sm:$0xff]
      %v177 = vld [vmem:[%s1 + $0xb0] sm:$0xff]
      %v178 = vld [vmem:[%s1 + $0xb8] sm:$0xff]
      %v179 = vld [vmem:[%s1 + $0xc0] sm:$0xff]
      %v180 = vld [vmem:[%s1 + $0xc8] sm:$0xff]
      %v181 = vld [vmem:[%s1 + $0xd0] sm:$0xff]
      %v182 = vld [vmem:[%s1 + $0xd8] sm:$0xff]
      %v183 = vld [vmem:[%s1 + $0xe0] sm:$0xff]
      %v184 = vld [vmem:[%s1 + $0xe8] sm:$0xff]
      %v185 = vld [vmem:[%s1 + $0xf0] sm:$0xff]
      %v186 = vld [vmem:[%s1 + $0xf8] sm:$0xff]
      %v219 = vunpack.c.l.b16 %v155
      %v220 = vunpack.c.h.b16 %v155
      %v221 = vunpack.c.l.b16 %v156
      %v222 = vunpack.c.h.b16 %v156
      %v223 = vunpack.c.l.b16 %v157
      %v224 = vunpack.c.h.b16 %v157
      %v225 = vunpack.c.l.b16 %v158
      %v226 = vunpack.c.h.b16 %v158
      %v227 = vunpack.c.l.b16 %v159
      %v228 = vunpack.c.h.b16 %v159
      %v229 = vunpack.c.l.b16 %v160
      %v230 = vunpack.c.h.b16 %v160
      %v231 = vunpack.c.l.b16 %v161
      %v232 = vunpack.c.h.b16 %v161
      %v233 = vunpack.c.l.b16 %v162
      %v234 = vunpack.c.h.b16 %v162
      %v235 = vunpack.c.l.b16 %v163
      %v236 = vunpack.c.h.b16 %v163
      %v237 = vunpack.c.l.b16 %v164
      %v238 = vunpack.c.h.b16 %v164
      %v239 = vunpack.c.l.b16 %v165
      %v240 = vunpack.c.h.b16 %v165
      %v241 = vunpack.c.l.b16 %v166
      %v242 = vunpack.c.h.b16 %v166
      %v243 = vunpack.c.l.b16 %v167
      %v244 = vunpack.c.h.b16 %v167
      %v245 = vunpack.c.l.b16 %v168
      %v246 = vunpack.c.h.b16 %v168
      %v247 = vunpack.c.l.b16 %v169
      %v248 = vunpack.c.h.b16 %v169
      %v249 = vunpack.c.l.b16 %v170
      %v250 = vunpack.c.h.b16 %v170
      %v251 = vunpack.c.l.b16 %v171
      %v252 = vunpack.c.h.b16 %v171
      %v253 = vunpack.c.l.b16 %v172
      %v254 = vunpack.c.h.b16 %v172
      %v255 = vunpack.c.l.b16 %v173
      %v256 = vunpack.c.h.b16 %v173
      %v257 = vunpack.c.l.b16 %v174
      %v258 = vunpack.c.h.b16 %v174
      %v259 = vunpack.c.l.b16 %v175
      %v260 = vunpack.c.h.b16 %v175
      %v261 = vunpack.c.l.b16 %v176
      %v262 = vunpack.c.h.b16 %v176
      %v263 = vunpack.c.l.b16 %v177
      %v264 = vunpack.c.h.b16 %v177
      %v265 = vunpack.c.l.b16 %v178
      %v266 = vunpack.c.h.b16 %v178
      %v267 = vunpack.c.l.b16 %v179
      %v268 = vunpack.c.h.b16 %v179
      %v269 = vunpack.c.l.b16 %v180
      %v270 = vunpack.c.h.b16 %v180
      %v271 = vunpack.c.l.b16 %v181
      %v272 = vunpack.c.h.b16 %v181
      %v273 = vunpack.c.l.b16 %v182
      %v274 = vunpack.c.h.b16 %v182
      %v275 = vunpack.c.l.b16 %v183
      %v276 = vunpack.c.h.b16 %v183
      %v277 = vunpack.c.l.b16 %v184
      %v278 = vunpack.c.h.b16 %v184
      %v279 = vunpack.c.l.b16 %v185
      %v280 = vunpack.c.h.b16 %v185
      %v281 = vunpack.c.l.b16 %v186
      %v282 = vunpack.c.h.b16 %v186
      %v283 = vpack.c.b16 %v223, %v219
      %v284 = vpack.c.b16 %v224, %v220
      %v285 = vpack.c.b16 %v225, %v221
      %v286 = vpack.c.b16 %v226, %v222
      %v287 = vpack.c.b16 %v231, %v227
      %v288 = vpack.c.b16 %v232, %v228
      %v289 = vpack.c.b16 %v233, %v229
      %v290 = vpack.c.b16 %v234, %v230
      %v291 = vpack.c.b16 %v239, %v235
      %v292 = vpack.c.b16 %v240, %v236
      %v293 = vpack.c.b16 %v241, %v237
      %v294 = vpack.c.b16 %v242, %v238
      %v295 = vpack.c.b16 %v247, %v243
      %v296 = vpack.c.b16 %v248, %v244
      %v297 = vpack.c.b16 %v249, %v245
      %v298 = vpack.c.b16 %v250, %v246
      %v299 = vpack.c.b16 %v255, %v251
      %v300 = vpack.c.b16 %v256, %v252
      %v301 = vpack.c.b16 %v257, %v253
      %v302 = vpack.c.b16 %v258, %v254
      %v303 = vpack.c.b16 %v263, %v259
      %v304 = vpack.c.b16 %v264, %v260
      %v305 = vpack.c.b16 %v265, %v261
      %v306 = vpack.c.b16 %v266, %v262
      %v307 = vpack.c.b16 %v271, %v267
      %v308 = vpack.c.b16 %v272, %v268
      %v309 = vpack.c.b16 %v273, %v269
      %v310 = vpack.c.b16 %v274, %v270
      %v311 = vpack.c.b16 %v279, %v275
      %v312 = vpack.c.b16 %v280, %v276
      %v313 = vpack.c.b16 %v281, %v277
      %v314 = vpack.c.b16 %v282, %v278
      %347 = vmatprep.subr.bf16.mxu0 %v284
      %348 = vmatpush1.bf16.msra.mxu0 %v283
      %349 = vmatprep.subr.bf16.mxu0 %v288
      %350 = vmatpush1.bf16.msra.mxu0 %v287
      %351 = vmatprep.subr.bf16.mxu0 %v292
      %352 = vmatpush1.bf16.msra.mxu0 %v291
      %353 = vmatprep.subr.bf16.mxu0 %v296
      %354 = vmatpush1.bf16.msra.mxu0 %v295
      %355 = vmatprep.subr.bf16.mxu0 %v300
      %356 = vmatpush1.bf16.msra.mxu0 %v299
      %357 = vmatprep.subr.bf16.mxu0 %v304
      %358 = vmatpush1.bf16.msra.mxu0 %v303
      %359 = vmatprep.subr.bf16.mxu0 %v308
      %360 = vmatpush1.bf16.msra.mxu0 %v307
      %361 = vmatprep.subr.bf16.mxu0 %v312
      %362 = vmatpush1.bf16.msra.mxu0 %v311
      %363 = vmatprep.subr.bf16.mxu0 0
      %364 = vmatpush1.bf16.msra.mxu0 0
      %365 = vmatprep.subr.bf16.mxu0 0
      %366 = vmatpush1.bf16.msra.mxu0 0
      %367 = vmatprep.subr.bf16.mxu0 0
      %368 = vmatpush1.bf16.msra.mxu0 0
      %369 = vmatprep.subr.bf16.mxu0 0
      %370 = vmatpush1.bf16.msra.mxu0 0
      %371 = vmatprep.subr.bf16.mxu0 0
      %372 = vmatpush1.bf16.msra.mxu0 0
      %373 = vmatprep.subr.bf16.mxu0 0
      %374 = vmatpush1.bf16.msra.mxu0 0
      %375 = vmatprep.subr.bf16.mxu0 0
      %376 = vmatpush1.bf16.msra.mxu0 0
      %377 = vmatprep.subr.bf16.mxu0 0
      %378 = vmatpush1.bf16.msra.mxu0 0
      %379 = vmatprep.mubr.bf16.mxu0 0
      %380 = vmatmul.mubr.bf16.gmra.mrb[0].mxu0 %v154
      %v381 = vpop.f32.mrb[0].mxu0
      %v382 = vadd.f32 0.0, %v381
      %v383 = vpop.f32.mrb[0].mxu0
      %v384 = vadd.f32 0.0, %v383
      %v385 = vpop.f32.mrb[0].mxu0
      %v386 = vpop.f32.mrb[0].mxu0
      %387 = vdwg.mxu0
      %388 = vmatprep.subr.bf16.mxu0 %v286
      %389 = vmatpush1.bf16.msra.mxu0 %v285
      %390 = vmatprep.subr.bf16.mxu0 %v290
      %391 = vmatpush1.bf16.msra.mxu0 %v289
      %392 = vmatprep.subr.bf16.mxu0 %v294
      %393 = vmatpush1.bf16.msra.mxu0 %v293
      %394 = vmatprep.subr.bf16.mxu0 %v298
      %395 = vmatpush1.bf16.msra.mxu0 %v297
      %396 = vmatprep.subr.bf16.mxu0 %v302
      %397 = vmatpush1.bf16.msra.mxu0 %v301
      %398 = vmatprep.subr.bf16.mxu0 %v306
      %399 = vmatpush1.bf16.msra.mxu0 %v305
      %400 = vmatprep.subr.bf16.mxu0 %v310
      %401 = vmatpush1.bf16.msra.mxu0 %v309
      %402 = vmatprep.subr.bf16.mxu0 %v314
      %403 = vmatpush1.bf16.msra.mxu0 %v313
      %404 = vmatprep.subr.bf16.mxu0 0
      %405 = vmatpush1.bf16.msra.mxu0 0
      %406 = vmatprep.subr.bf16.mxu0 0
      %407 = vmatpush1.bf16.msra.mxu0 0
      %408 = vmatprep.subr.bf16.mxu0 0
      %409 = vmatpush1.bf16.msra.mxu0 0
      %410 = vmatprep.subr.bf16.mxu0 0
      %411 = vmatpush1.bf16.msra.mxu0 0
      %412 = vmatprep.subr.bf16.mxu0 0
      %413 = vmatpush1.bf16.msra.mxu0 0
      %414 = vmatprep.subr.bf16.mxu0 0
      %415 = vmatpush1.bf16.msra.mxu0 0
      %416 = vmatprep.subr.bf16.mxu0 0
      %417 = vmatpush1.bf16.msra.mxu0 0
      %418 = vmatprep.subr.bf16.mxu0 0
      %419 = vmatpush1.bf16.msra.mxu0 0
      %420 = vmatprep.mubr.bf16.mxu0 0
      %421 = vmatmul.mubr.bf16.gmra.mrb[0].mxu0 %v154
      %v422 = vpop.f32.mrb[0].mxu0
      %v423 = vadd.f32 0.0, %v422
      %v424 = vpop.f32.mrb[0].mxu0
      %v425 = vadd.f32 0.0, %v424
      %v426 = vpop.f32.mrb[0].mxu0
      %v427 = vpop.f32.mrb[0].mxu0
      %428 = vdwg.mxu0
      %v429 = vadd.f32 %v149, %v382
      %v430 = vadd.f32 %v150, %v384
      %v431 = vadd.f32 %v151, %v423
      %v432 = vadd.f32 %v152, %v425
      %v433 = vsub.f32 0.0, %v429
      %v434 = vmul.f32 %v433, 1.442695
      %v435 = vpow.pop %v434
      %v436 = vadd.f32 %v435, 1.0
      %v437 = vrcp.pop %v436
      %v438 = vmul.f32 1.0, %v437
      %v439 = vsub.f32 0.0, %v430
      %v440 = vmul.f32 %v439, 1.442695
      %v441 = vpow.pop %v440
      %v442 = vadd.f32 %v441, 1.0
      %v443 = vrcp.pop %v442
      %v444 = vmul.f32 1.0, %v443
      %v445 = vtanh.pop %v431
      %v446 = vsub.f32 0.0, %v432
      %v447 = vmul.f32 %v446, 1.442695
      %v448 = vpow.pop %v447
      %v449 = vadd.f32 %v448, 1.0
      %v450 = vrcp.pop %v449
      %v451 = vmul.f32 1.0, %v450
      %v452 = vld [vmem:[#allocation3] sm:$0xff]
      %v453 = vmul.f32 %v444, %v452
      %v454 = vmul.f32 %v438, %v445
      %v455 = vadd.f32 %v453, %v454
      %v456 = vtanh.pop %v455
      %v457 = vmul.f32 %v451, %v456
      %458 = vst [vmem:[#allocation3] sm:$0xff] %v455
      %459 = vst [vmem:[#allocation2] sm:$0xff] %v457
      %v460 = vpack.c.bf16 %v457, %v457
      %461 = vst [vmem:[%s141] sm:$0xf] %v460
      %p462 = scmp.lt.s32.totalorder %s13, 7
      %s463 = scalar_select %p462, %s13, 7
      %s464 = smul.addr %s463, 4
      %s465 = scalar_lea.vmem %s2, %s464
      // Predicated region
      $region33: #{decoder_rnn_forward.8} parent=27 // pred_check
        %p466 = pneg %p78
      $region34: #{decoder_rnn_forward.8} parent=27 // pred_check_branch
        %468 = sbr.rel (%p466) target = $region36
      $region35: #{decoder_rnn_forward.8} parent=27 // pred_region
        _
      $region36: #{decoder_rnn_forward.8} parent=27 // pred_fallthru
        _
    $region28: #{decoder_rnn_forward.8} parent=5 // pred_fallthru
      _
    %p469 = scmp.le.s32.totalorder 2, %s8
    // Predicated region
    $region37: #{decoder_rnn_forward.8} parent=5 // pred_check
      %p470 = pneg %p469
    $region38: #{decoder_rnn_forward.8} parent=5 // pred_check_branch
      %472 = sbr.rel (%p470) target = $region40
    $region39: #{decoder_rnn_forward.8} parent=5 // pred_region
      %s473 = ssub.s32 %s8, 2
      // Predicated region
      $region41: #{decoder_rnn_forward.8} parent=39 // pred_check
        %p474 = pneg %p84
      $region42: #{decoder_rnn_forward.8} parent=39 // pred_check_branch
        %476 = sbr.rel (%p474) target = $region44
      $region43: #{decoder_rnn_forward.8} parent=39 // pred_region
        %p477 = scmp.lt.s32.totalorder %s14, 7
        %s478 = scalar_select %p477, %s14, 7
        %s479 = smul.addr %s478, 4
        %s480 = scalar_lea.vmem %s2, %s479
      $region44: #{decoder_rnn_forward.8} parent=39 // pred_fallthru
        _
    $region40: #{decoder_rnn_forward.8} parent=5 // pred_fallthru
      _
  $region6: #{decoder_rnn_forward.8} parent=0 // loop_footer
    %s12 = sadd.s32 1, %s8
  $region7: #{decoder_rnn_forward.8} parent=0 // loop_footer_branch
    %7 = sbr.rel target = $region3
  $region8: #{decoder_rnn_forward.8} parent=0 // loop_exit
    _

// kernel: decoder_rnn_forward.13
$region0: #{decoder_rnn_forward.13}
  #allocation0 [shape = 'u32[]', space=smem, size = 0x4, offset = 0x4, fixed_abs, tag = 'smem constant byte address 0x4 - core index']
  #allocation1 [shape = 'u32[144,128]{1,0:T(1,128)}', space=vmem, size = 0x12000, scoped, tag = 'internal scratch']
  %s0 = inlined_call_operand.vmem [shape: bf16[8,128], index: 0, kind: input, shape index: {}]
  %s1 = inlined_call_operand.vmem [shape: bf16[128,128], index: 1, kind: input, shape index: {}]
  %s2 = inlined_call_operand.vmem [shape: f32[1,128], index: 2, kind: input, shape index: {}]
  %s3 = inlined_call_operand.vmem [shape: bf16[128,128], index: 3, kind: input, shape index: {}]
  %s4 = inlined_call_operand.vmem [shape: f32[1,128], index: 4, kind: input, shape index: {}]
  %s5 = inlined_call_operand.hbm [shape: f32[8,128], index: 5, kind: output, shape index: {}]
  %s6 = sld [smem:[#allocation0]]
  $region30: #{decoder_rnn_forward.13} parent=0
    _
  %s8 = ssub.s32 1, %s6
  %s9 = scalar_select 0, %s8, %s6
  $region1: #{decoder_rnn_forward.13} parent=0
    #allocation2 [shape = 'u8[4096]{0}', space=vmem, size = 0x1000, scoped, tag = 'output window, operand 0, single buffered']
    #allocation3 [shape = 's32[1]{0}', space=sflag, size = 0x4, scoped, tag = 'scoped memory for decoder_rnn_forward.13']
    %10 = vsyncpa [#allocation3], 0
    // Predicated region
    $region2: #{decoder_rnn_forward.13} parent=1 // pred_check
      _
    $region3: #{decoder_rnn_forward.13} parent=1 // pred_check_branch
      %12 = sbr.rel (0) target = $region5
    $region4: #{decoder_rnn_forward.13} parent=1 // pred_region
      _
    $region5: #{decoder_rnn_forward.13} parent=1 // pred_fallthru
      _
    // Predicated region
    $region6: #{decoder_rnn_forward.13} parent=1 // pred_check
      _
    $region7: #{decoder_rnn_forward.13} parent=1 // pred_check_branch
      %14 = sbr.rel (0) target = $region9
    $region8: #{decoder_rnn_forward.13} parent=1 // pred_region
      _
    $region9: #{decoder_rnn_forward.13} parent=1 // pred_fallthru
      _
    // Predicated region
    $region10: #{decoder_rnn_forward.13} parent=1 // pred_check
      _
    $region11: #{decoder_rnn_forward.13} parent=1 // pred_check_branch
      %16 = sbr.rel (0) target = $region13
    $region12: #{decoder_rnn_forward.13} parent=1 // pred_region
      _
    $region13: #{decoder_rnn_forward.13} parent=1 // pred_fallthru
      _
    // Predicated region
    $region14: #{decoder_rnn_forward.13} parent=1 // pred_check
      _
    $region15: #{decoder_rnn_forward.13} parent=1 // pred_check_branch
      %18 = sbr.rel (0) target = $region17
    $region16: #{decoder_rnn_forward.13} parent=1 // pred_region
      _
    $region17: #{decoder_rnn_forward.13} parent=1 // pred_fallthru
      _
    // Predicated region
    $region18: #{decoder_rnn_forward.13} parent=1 // pred_check
      _
    $region19: #{decoder_rnn_forward.13} parent=1 // pred_check_branch
      %20 = sbr.rel (0) target = $region21
    $region20: #{decoder_rnn_forward.13} parent=1 // pred_region
      _
    $region21: #{decoder_rnn_forward.13} parent=1 // pred_fallthru
      _
    %v22 = vld [vmem:[%s0] sm:$0xf]
    %v23 = vld [vmem:[%s1] sm:$0xf]
    %v24 = vld [vmem:[%s1 + $0x4] sm:$0xf]
    %v25 = vld [vmem:[%s1 + $0x8] sm:$0xf]
    %v26 = vld [vmem:[%s1 + $0xc] sm:$0xf]
    %v27 = vld [vmem:[%s1 + $0x10] sm:$0xf]
    %v28 = vld [vmem:[%s1 + $0x14] sm:$0xf]
    %v29 = vld [vmem:[%s1 + $0x18] sm:$0xf]
    %v30 = vld [vmem:[%s1 + $0x1c] sm:$0xf]
    %v31 = vld [vmem:[%s1 + $0x20] sm:$0xf]
    %v32 = vld [vmem:[%s1 + $0x24] sm:$0xf]
    %v33 = vld [vmem:[%s1 + $0x28] sm:$0xf]
    %v34 = vld [vmem:[%s1 + $0x2c] sm:$0xf]
    %v35 = vld [vmem:[%s1 + $0x30] sm:$0xf]
    %v36 = vld [vmem:[%s1 + $0x34] sm:$0xf]
    %v37 = vld [vmem:[%s1 + $0x38] sm:$0xf]
    %v38 = vld [vmem:[%s1 + $0x3c] sm:$0xf]
    %v39 = vld [vmem:[%s2] sm:$0x1]
    %v41 = vlaneseq
    %v42 = vshrl.u32 %v41, 7
    %v43 = vsub.s32 0, %v42
    %v44 = vrot.slane %v39, %v43
    %v62 = vunpack.c.l.b16 %v23
    %v63 = vunpack.c.l.b16 %v24
    %v64 = vunpack.c.l.b16 %v25
    %v65 = vunpack.c.l.b16 %v26
    %v66 = vunpack.c.l.b16 %v27
    %v67 = vunpack.c.l.b16 %v28
    %v68 = vunpack.c.l.b16 %v29
    %v69 = vunpack.c.l.b16 %v30
    %v70 = vunpack.c.l.b16 %v31
    %v71 = vunpack.c.l.b16 %v32
    %v72 = vunpack.c.l.b16 %v33
    %v73 = vunpack.c.l.b16 %v34
    %v74 = vunpack.c.l.b16 %v35
    %v75 = vunpack.c.l.b16 %v36
    %v76 = vunpack.c.l.b16 %v37
    %v77 = vunpack.c.l.b16 %v38
    %v78 = vpack.c.b16 %v63, %v62
    %v79 = vpack.c.b16 %v65, %v64
    %v80 = vpack.c.b16 %v67, %v66
    %v81 = vpack.c.b16 %v69, %v68
    %v82 = vpack.c.b16 %v71, %v70
    %v83 = vpack.c.b16 %v73, %v72
    %v84 = vpack.c.b16 %v75, %v74
    %v85 = vpack.c.b16 %v77, %v76
    %94 = vmatprep.subr.bf16.mxu0 0
    %95 = vmatpush1.bf16.msra.mxu0 %v78
    %96 = vmatprep.subr.bf16.mxu0 0
    %97 = vmatpush1.bf16.msra.mxu0 %v79
    %98 = vmatprep.subr.bf16.mxu0 0
    %99 = vmatpush1.bf16.msra.mxu0 %v80
    %100 = vmatprep.subr.bf16.mxu0 0
    %101 = vmatpush1.bf16.msra.mxu0 %v81
    %102 = vmatprep.subr.bf16.mxu0 0
    %103 = vmatpush1.bf16.msra.mxu0 %v82
    %104 = vmatprep.subr.bf16.mxu0 0
    %105 = vmatpush1.bf16.msra.mxu0 %v83
    %106 = vmatprep.subr.bf16.mxu0 0
    %107 = vmatpush1.bf16.msra.mxu0 %v84
    %108 = vmatprep.subr.bf16.mxu0 0
    %109 = vmatpush1.bf16.msra.mxu0 %v85
    %110 = vmatprep.subr.bf16.mxu0 0
    %111 = vmatpush1.bf16.msra.mxu0 0
    %112 = vmatprep.subr.bf16.mxu0 0
    %113 = vmatpush1.bf16.msra.mxu0 0
    %114 = vmatprep.subr.bf16.mxu0 0
    %115 = vmatpush1.bf16.msra.mxu0 0
    %116 = vmatprep.subr.bf16.mxu0 0
    %117 = vmatpush1.bf16.msra.mxu0 0
    %118 = vmatprep.subr.bf16.mxu0 0
    %119 = vmatpush1.bf16.msra.mxu0 0
    %120 = vmatprep.subr.bf16.mxu0 0
    %121 = vmatpush1.bf16.msra.mxu0 0
    %122 = vmatprep.subr.bf16.mxu0 0
    %123 = vmatpush1.bf16.msra.mxu0 0
    %124 = vmatprep.subr.bf16.mxu0 0
    %125 = vmatpush1.bf16.msra.mxu0 0
    %126 = vmatprep.mubr.bf16.mxu0 0
    %127 = vmatmul.mubr.bf16.gmra.mrb[0].mxu0 %v22
    %v128 = vpop.f32.mrb[0].mxu0
    %v129 = vadd.f32 %v44, %v128
    %v130 = vpop.f32.mrb[0].mxu0
    %v131 = vpop.f32.mrb[0].mxu0
    %v132 = vpop.f32.mrb[0].mxu0
    %133 = vdwg.mxu0
    %v134 = vmax.f32 %v129, 0.0
    %v135 = vpack.c.bf16 %v134, %v134
    %v136 = vld [vmem:[%s3] sm:$0xf]
    %v137 = vld [vmem:[%s3 + $0x4] sm:$0xf]
    %v138 = vld [vmem:[%s3 + $0x8] sm:$0xf]
    %v139 = vld [vmem:[%s3 + $0xc] sm:$0xf]
    %v140 = vld [vmem:[%s3 + $0x10] sm:$0xf]
    %v141 = vld [vmem:[%s3 + $0x14] sm:$0xf]
    %v142 = vld [vmem:[%s3 + $0x18] sm:$0xf]
    %v143 = vld [vmem:[%s3 + $0x1c] sm:$0xf]
    %v144 = vld [vmem:[%s3 + $0x20] sm:$0xf]
    %v145 = vld [vmem:[%s3 + $0x24] sm:$0xf]
    %v146 = vld [vmem:[%s3 + $0x28] sm:$0xf]
    %v147 = vld [vmem:[%s3 + $0x2c] sm:$0xf]
    %v148 = vld [vmem:[%s3 + $0x30] sm:$0xf]
    %v149 = vld [vmem:[%s3 + $0x34] sm:$0xf]
    %v150 = vld [vmem:[%s3 + $0x38] sm:$0xf]
    %v151 = vld [vmem:[%s3 + $0x3c] sm:$0xf]
    %v152 = vld [vmem:[%s4] sm:$0x1]
    %v154 = vlaneseq
    %v155 = vshrl.u32 %v154, 7
    %v156 = vsub.s32 0, %v155
    %v157 = vrot.slane %v152, %v156
    %v175 = vunpack.c.l.b16 %v136
    %v176 = vunpack.c.l.b16 %v137
    %v177 = vunpack.c.l.b16 %v138
    %v178 = vunpack.c.l.b16 %v139
    %v179 = vunpack.c.l.b16 %v140
    %v180 = vunpack.c.l.b16 %v141
    %v181 = vunpack.c.l.b16 %v142
    %v182 = vunpack.c.l.b16 %v143
    %v183 = vunpack.c.l.b16 %v144
    %v184 = vunpack.c.l.b16 %v145
    %v185 = vunpack.c.l.b16 %v146
    %v186 = vunpack.c.l.b16 %v147
    %v187 = vunpack.c.l.b16 %v148
    %v188 = vunpack.c.l.b16 %v149
    %v189 = vunpack.c.l.b16 %v150
    %v190 = vunpack.c.l.b16 %v151
    %v191 = vpack.c.b16 %v176, %v175
    %v192 = vpack.c.b16 %v178, %v177
    %v193 = vpack.c.b16 %v180, %v179
    %v194 = vpack.c.b16 %v182, %v181
    %v195 = vpack.c.b16 %v184, %v183
    %v196 = vpack.c.b16 %v186, %v185
    %v197 = vpack.c.b16 %v188, %v187
    %v198 = vpack.c.b16 %v190, %v189
    %207 = vmatprep.subr.bf16.mxu0 0
    %208 = vmatpush1.bf16.msra.mxu0 %v191
    %209 = vmatprep.subr.bf16.mxu0 0
    %210 = vmatpush1.bf16.msra.mxu0 %v192
    %211 = vmatprep.subr.bf16.mxu0 0
    %212 = vmatpush1.bf16.msra.mxu0 %v193
    %213 = vmatprep.subr.bf16.mxu0 0
    %214 = vmatpush1.bf16.msra.mxu0 %v194
    %215 = vmatprep.subr.bf16.mxu0 0
    %216 = vmatpush1.bf16.msra.mxu0 %v195
    %217 = vmatprep.subr.bf16.mxu0 0
    %218 = vmatpush1.bf16.msra.mxu0 %v196
    %219 = vmatprep.subr.bf16.mxu0 0
    %220 = vmatpush1.bf16.msra.mxu0 %v197
    %221 = vmatprep.subr.bf16.mxu0 0
    %222 = vmatpush1.bf16.msra.mxu0 %v198
    %223 = vmatprep.subr.bf16.mxu0 0
    %224 = vmatpush1.bf16.msra.mxu0 0
    %225 = vmatprep.subr.bf16.mxu0 0
    %226 = vmatpush1.bf16.msra.mxu0 0
    %227 = vmatprep.subr.bf16.mxu0 0
    %228 = vmatpush1.bf16.msra.mxu0 0
    %229 = vmatprep.subr.bf16.mxu0 0
    %230 = vmatpush1.bf16.msra.mxu0 0
    %231 = vmatprep.subr.bf16.mxu0 0
    %232 = vmatpush1.bf16.msra.mxu0 0
    %233 = vmatprep.subr.bf16.mxu0 0
    %234 = vmatpush1.bf16.msra.mxu0 0
    %235 = vmatprep.subr.bf16.mxu0 0
    %236 = vmatpush1.bf16.msra.mxu0 0
    %237 = vmatprep.subr.bf16.mxu0 0
    %238 = vmatpush1.bf16.msra.mxu0 0
    %239 = vmatprep.mubr.bf16.mxu0 0
    %240 = vmatmul.mubr.bf16.gmra.mrb[0].mxu0 %v135
    %v241 = vpop.f32.mrb[0].mxu0
    %v242 = vadd.f32 %v157, %v241
    %v243 = vpop.f32.mrb[0].mxu0
    %v244 = vpop.f32.mrb[0].mxu0
    %v245 = vpop.f32.mrb[0].mxu0
    %246 = vdwg.mxu0
    %247 = vst [vmem:[#allocation2] sm:$0xff] %v242
    // Predicated region
    $region22: #{decoder_rnn_forward.13} parent=1 // pred_check
      _
    $region23: #{decoder_rnn_forward.13} parent=1 // pred_check_branch
      %249 = sbr.rel (0) target = $region25
    $region24: #{decoder_rnn_forward.13} parent=1 // pred_region
      %s251 = ssub.s32 128, 128
      %252 = vsyncadd [#allocation3], %s251
      %s254 = sshll.u32 [#allocation2], 4
      %s255 = int_to_ptr.vmem [resolvable:$true] %s254
      %257 = dma.vmem_to_hbm [thread:$0]  %s255, 128, %s5, [#allocation3]
    $region25: #{decoder_rnn_forward.13} parent=1 // pred_fallthru
      _
    // Predicated region
    $region26: #{decoder_rnn_forward.13} parent=1 // pred_check
      _
    $region27: #{decoder_rnn_forward.13} parent=1 // pred_check_branch
      %259 = sbr.rel (0) target = $region29
    $region28: #{decoder_rnn_forward.13} parent=1 // pred_region
      %260 = dma.done [#allocation3], 128
    $region29: #{decoder_rnn_forward.13} parent=1 // pred_fallthru
      _
    %261 = vsyncpa [#allocation3], 1

// kernel: decoder_rnn_forward.7
$region0: #{decoder_rnn_forward.7}
  #allocation0 [shape = 'u32[]', space=smem, size = 0x4, offset = 0x4, fixed_abs, tag = 'smem constant byte address 0x4 - core index']
  #allocation1 [shape = 'u32[144,128]{1,0:T(1,128)}', space=vmem, size = 0x12000, scoped, tag = 'internal scratch']
  #allocation2 [shape = 'f32[64,512]{1,0:T(8,128)}', space=vmem, size = 0x20000, scoped, tag = 'scratch operand']
  %s0 = inlined_call_operand.vmem [shape: bf16[64,128], index: 0, kind: input, shape index: {}]
  %s1 = inlined_call_operand.vmem [shape: bf16[128,512], index: 1, kind: input, shape index: {}]
  %s2 = inlined_call_operand.vmem [shape: f32[1,512], index: 2, kind: input, shape index: {}]
  %s3 = inlined_call_operand.vmem [shape: f32[64,512], index: 3, kind: output, shape index: {}]
  %s4 = sld [smem:[#allocation0]]
  $region30: #{decoder_rnn_forward.7} parent=0
    _
  %s6 = ssub.s32 1, %s4
  %s7 = scalar_select 0, %s6, %s4
  // Predicated region
  $region2: #{decoder_rnn_forward.7} parent=0 // pred_check
    _
  $region3: #{decoder_rnn_forward.7} parent=0 // pred_check_branch
    %9 = sbr.rel (0) target = $region5
  $region4: #{decoder_rnn_forward.7} parent=0 // pred_region
    _
  $region5: #{decoder_rnn_forward.7} parent=0 // pred_fallthru
    _
  // Predicated region
  $region6: #{decoder_rnn_forward.7} parent=0 // pred_check
    _
  $region7: #{decoder_rnn_forward.7} parent=0 // pred_check_branch
    %11 = sbr.rel (0) target = $region9
  $region8: #{decoder_rnn_forward.7} parent=0 // pred_region
    _
  $region9: #{decoder_rnn_forward.7} parent=0 // pred_fallthru
    _
  // Predicated region
  $region10: #{decoder_rnn_forward.7} parent=0 // pred_check
    _
  $region11: #{decoder_rnn_forward.7} parent=0 // pred_check_branch
    %13 = sbr.rel (0) target = $region13
  $region12: #{decoder_rnn_forward.7} parent=0 // pred_region
    _
  $region13: #{decoder_rnn_forward.7} parent=0 // pred_fallthru
    _
  %p15 = scmp.eq.s32.totalorder 0, 0
  // Predicated region
  $region14: #{decoder_rnn_forward.7} parent=0 // pred_check
    %p16 = pneg %p15
  $region15: #{decoder_rnn_forward.7} parent=0 // pred_check_branch
    %18 = sbr.rel (%p16) target = $region17
  $region16: #{decoder_rnn_forward.7} parent=0 // pred_region
    %19 = vst [vmem:[#allocation2] sm:$0xff] 0.0
    %20 = vst [vmem:[#allocation2 + $0x8] sm:$0xff] 0.0
    %21 = vst [vmem:[#allocation2 + $0x10] sm:$0xff] 0.0
    %22 = vst [vmem:[#allocation2 + $0x18] sm:$0xff] 0.0
    %23 = vst [vmem:[#allocation2 + $0x20] sm:$0xff] 0.0
    %24 = vst [vmem:[#allocation2 + $0x28] sm:$0xff] 0.0
    %25 = vst [vmem:[#allocation2 + $0x30] sm:$0xff] 0.0
    %26 = vst [vmem:[#allocation2 + $0x38] sm:$0xff] 0.0
    %27 = vst [vmem:[#allocation2 + $0x40] sm:$0xff] 0.0
    %28 = vst [vmem:[#allocation2 + $0x48] sm:$0xff] 0.0
    %29 = vst [vmem:[#allocation2 + $0x50] sm:$0xff] 0.0
    %30 = vst [vmem:[#allocation2 + $0x58] sm:$0xff] 0.0
    %31 = vst [vmem:[#allocation2 + $0x60] sm:$0xff] 0.0
    %32 = vst [vmem:[#allocation2 + $0x68] sm:$0xff] 0.0
    %33 = vst [vmem:[#allocation2 + $0x70] sm:$0xff] 0.0
    %34 = vst [vmem:[#allocation2 + $0x78] sm:$0xff] 0.0
    %35 = vst [vmem:[#allocation2 + $0x80] sm:$0xff] 0.0
    %36 = vst [vmem:[#allocation2 + $0x88] sm:$0xff] 0.0
    %37 = vst [vmem:[#allocation2 + $0x90] sm:$0xff] 0.0
    %38 = vst [vmem:[#allocation2 + $0x98] sm:$0xff] 0.0
    %39 = vst [vmem:[#allocation2 + $0xa0] sm:$0xff] 0.0
    %40 = vst [vmem:[#allocation2 + $0xa8] sm:$0xff] 0.0
    %41 = vst [vmem:[#allocation2 + $0xb0] sm:$0xff] 0.0
    %42 = vst [vmem:[#allocation2 + $0xb8] sm:$0xff] 0.0
    %43 = vst [vmem:[#allocation2 + $0xc0] sm:$0xff] 0.0
    %44 = vst [vmem:[#allocation2 + $0xc8] sm:$0xff] 0.0
    %45 = vst [vmem:[#allocation2 + $0xd0] sm:$0xff] 0.0
    %46 = vst [vmem:[#allocation2 + $0xd8] sm:$0xff] 0.0
    %47 = vst [vmem:[#allocation2 + $0xe0] sm:$0xff] 0.0
    %48 = vst [vmem:[#allocation2 + $0xe8] sm:$0xff] 0.0
    %49 = vst [vmem:[#allocation2 + $0xf0] sm:$0xff] 0.0
    %50 = vst [vmem:[#allocation2 + $0xf8] sm:$0xff] 0.0
  $region17: #{decoder_rnn_forward.7} parent=0 // pred_fallthru
    _
  %v51 = vld [vmem:[#allocation2] sm:$0xff]
  %v52 = vld [vmem:[#allocation2 + $0x8] sm:$0xff]
  %v53 = vld [vmem:[#allocation2 + $0x10] sm:$0xff]
  %v54 = vld [vmem:[#allocation2 + $0x18] sm:$0xff]
  %v55 = vld [vmem:[#allocation2 + $0x20] sm:$0xff]
  %v56 = vld [vmem:[#allocation2 + $0x28] sm:$0xff]
  %v57 = vld [vmem:[#allocation2 + $0x30] sm:$0xff]
  %v58 = vld [vmem:[#allocation2 + $0x38] sm:$0xff]
  %v59 = vld [vmem:[#allocation2 + $0x40] sm:$0xff]
  %v60 = vld [vmem:[#allocation2 + $0x48] sm:$0xff]
  %v61 = vld [vmem:[#allocation2 + $0x50] sm:$0xff]
  %v62 = vld [vmem:[#allocation2 + $0x58] sm:$0xff]
  %v63 = vld [vmem:[#allocation2 + $0x60] sm:$0xff]
  %v64 = vld [vmem:[#allocation2 + $0x68] sm:$0xff]
  %v65 = vld [vmem:[#allocation2 + $0x70] sm:$0xff]
  %v66 = vld [vmem:[#allocation2 + $0x78] sm:$0xff]
  %v67 = vld [vmem:[#allocation2 + $0x80] sm:$0xff]
  %v68 = vld [vmem:[#allocation2 + $0x88] sm:$0xff]
  %v69 = vld [vmem:[#allocation2 + $0x90] sm:$0xff]
  %v70 = vld [vmem:[#allocation2 + $0x98] sm:$0xff]
  %v71 = vld [vmem:[#allocation2 + $0xa0] sm:$0xff]
  %v72 = vld [vmem:[#allocation2 + $0xa8] sm:$0xff]
  %v73 = vld [vmem:[#allocation2 + $0xb0] sm:$0xff]
  %v74 = vld [vmem:[#allocation2 + $0xb8] sm:$0xff]
  %v75 = vld [vmem:[#allocation2 + $0xc0] sm:$0xff]
  %v76 = vld [vmem:[#allocation2 + $0xc8] sm:$0xff]
  %v77 = vld [vmem:[#allocation2 + $0xd0] sm:$0xff]
  %v78 = vld [vmem:[#allocation2 + $0xd8] sm:$0xff]
  %v79 = vld [vmem:[#allocation2 + $0xe0] sm:$0xff]
  %v80 = vld [vmem:[#allocation2 + $0xe8] sm:$0xff]
  %v81 = vld [vmem:[#allocation2 + $0xf0] sm:$0xff]
  %v82 = vld [vmem:[#allocation2 + $0xf8] sm:$0xff]
  %v83 = vld [vmem:[%s0] sm:$0xf]
  %v84 = vld [vmem:[%s0 + $0x4] sm:$0xf]
  %v85 = vld [vmem:[%s0 + $0x8] sm:$0xf]
  %v86 = vld [vmem:[%s0 + $0xc] sm:$0xf]
  %v87 = vld [vmem:[%s0 + $0x10] sm:$0xf]
  %v88 = vld [vmem:[%s0 + $0x14] sm:$0xf]
  %v89 = vld [vmem:[%s0 + $0x18] sm:$0xf]
  %v90 = vld [vmem:[%s0 + $0x1c] sm:$0xf]
  %v91 = vld [vmem:[%s1] sm:$0xff]
  %v92 = vld [vmem:[%s1 + $0x8] sm:$0xff]
  %v93 = vld [vmem:[%s1 + $0x10] sm:$0xff]
  %v94 = vld [vmem:[%s1 + $0x18] sm:$0xff]
  %v95 = vld [vmem:[%s1 + $0x20] sm:$0xff]
  %v96 = vld [vmem:[%s1 + $0x28] sm:$0xff]
  %v97 = vld [vmem:[%s1 + $0x30] sm:$0xff]
  %v98 = vld [vmem:[%s1 + $0x38] sm:$0xff]
  %v99 = vld [vmem:[%s1 + $0x40] sm:$0xff]
  %v100 = vld [vmem:[%s1 + $0x48] sm:$0xff]
  %v101 = vld [vmem:[%s1 + $0x50] sm:$0xff]
  %v102 = vld [vmem:[%s1 + $0x58] sm:$0xff]
  %v103 = vld [vmem:[%s1 + $0x60] sm:$0xff]
  %v104 = vld [vmem:[%s1 + $0x68] sm:$0xff]
  %v105 = vld [vmem:[%s1 + $0x70] sm:$0xff]
  %v106 = vld [vmem:[%s1 + $0x78] sm:$0xff]
  %v107 = vld [vmem:[%s1 + $0x80] sm:$0xff]
  %v108 = vld [vmem:[%s1 + $0x88] sm:$0xff]
  %v109 = vld [vmem:[%s1 + $0x90] sm:$0xff]
  %v110 = vld [vmem:[%s1 + $0x98] sm:$0xff]
  %v111 = vld [vmem:[%s1 + $0xa0] sm:$0xff]
  %v112 = vld [vmem:[%s1 + $0xa8] sm:$0xff]
  %v113 = vld [vmem:[%s1 + $0xb0] sm:$0xff]
  %v114 = vld [vmem:[%s1 + $0xb8] sm:$0xff]
  %v115 = vld [vmem:[%s1 + $0xc0] sm:$0xff]
  %v116 = vld [vmem:[%s1 + $0xc8] sm:$0xff]
  %v117 = vld [vmem:[%s1 + $0xd0] sm:$0xff]
  %v118 = vld [vmem:[%s1 + $0xd8] sm:$0xff]
  %v119 = vld [vmem:[%s1 + $0xe0] sm:$0xff]
  %v120 = vld [vmem:[%s1 + $0xe8] sm:$0xff]
  %v121 = vld [vmem:[%s1 + $0xf0] sm:$0xff]
  %v122 = vld [vmem:[%s1 + $0xf8] sm:$0xff]
  %v131 = vunpack.c.l.b16 %v83
  %v132 = vunpack.c.l.b16 %v84
  %v133 = vunpack.c.l.b16 %v85
  %v134 = vunpack.c.l.b16 %v86
  %v135 = vunpack.c.l.b16 %v87
  %v136 = vunpack.c.l.b16 %v88
  %v137 = vunpack.c.l.b16 %v89
  %v138 = vunpack.c.l.b16 %v90
  %v139 = vpack.c.b16 %v132, %v131
  %v140 = vpack.c.b16 %v134, %v133
  %v141 = vpack.c.b16 %v136, %v135
  %v142 = vpack.c.b16 %v138, %v137
  %v179 = vunpack.c.l.b16 %v91
  %v180 = vunpack.c.h.b16 %v91
  %v181 = vunpack.c.l.b16 %v92
  %v182 = vunpack.c.h.b16 %v92
  %v183 = vunpack.c.l.b16 %v93
  %v184 = vunpack.c.h.b16 %v93
  %v185 = vunpack.c.l.b16 %v94
  %v186 = vunpack.c.h.b16 %v94
  %v187 = vunpack.c.l.b16 %v95
  %v188 = vunpack.c.h.b16 %v95
  %v189 = vunpack.c.l.b16 %v96
  %v190 = vunpack.c.h.b16 %v96
  %v191 = vunpack.c.l.b16 %v97
  %v192 = vunpack.c.h.b16 %v97
  %v193 = vunpack.c.l.b16 %v98
  %v194 = vunpack.c.h.b16 %v98
  %v195 = vunpack.c.l.b16 %v99
  %v196 = vunpack.c.h.b16 %v99
  %v197 = vunpack.c.l.b16 %v100
  %v198 = vunpack.c.h.b16 %v100
  %v199 = vunpack.c.l.b16 %v101
  %v200 = vunpack.c.h.b16 %v101
  %v201 = vunpack.c.l.b16 %v102
  %v202 = vunpack.c.h.b16 %v102
  %v203 = vunpack.c.l.b16 %v103
  %v204 = vunpack.c.h.b16 %v103
  %v205 = vunpack.c.l.b16 %v104
  %v206 = vunpack.c.h.b16 %v104
  %v207 = vunpack.c.l.b16 %v105
  %v208 = vunpack.c.h.b16 %v105
  %v209 = vunpack.c.l.b16 %v106
  %v210 = vunpack.c.h.b16 %v106
  %v211 = vunpack.c.l.b16 %v107
  %v212 = vunpack.c.h.b16 %v107
  %v213 = vunpack.c.l.b16 %v108
  %v214 = vunpack.c.h.b16 %v108
  %v215 = vunpack.c.l.b16 %v109
  %v216 = vunpack.c.h.b16 %v109
  %v217 = vunpack.c.l.b16 %v110
  %v218 = vunpack.c.h.b16 %v110
  %v219 = vunpack.c.l.b16 %v111
  %v220 = vunpack.c.h.b16 %v111
  %v221 = vunpack.c.l.b16 %v112
  %v222 = vunpack.c.h.b16 %v112
  %v223 = vunpack.c.l.b16 %v113
  %v224 = vunpack.c.h.b16 %v113
  %v225 = vunpack.c.l.b16 %v114
  %v226 = vunpack.c.h.b16 %v114
  %v227 = vunpack.c.l.b16 %v115
  %v228 = vunpack.c.h.b16 %v115
  %v229 = vunpack.c.l.b16 %v116
  %v230 = vunpack.c.h.b16 %v116
  %v231 = vunpack.c.l.b16 %v117
  %v232 = vunpack.c.h.b16 %v117
  %v233 = vunpack.c.l.b16 %v118
  %v234 = vunpack.c.h.b16 %v118
  %v235 = vunpack.c.l.b16 %v119
  %v236 = vunpack.c.h.b16 %v119
  %v237 = vunpack.c.l.b16 %v120
  %v238 = vunpack.c.h.b16 %v120
  %v239 = vunpack.c.l.b16 %v121
  %v240 = vunpack.c.h.b16 %v121
  %v241 = vunpack.c.l.b16 %v122
  %v242 = vunpack.c.h.b16 %v122
  %v243 = vpack.c.b16 %v183, %v179
  %v244 = vpack.c.b16 %v184, %v180
  %v245 = vpack.c.b16 %v185, %v181
  %v246 = vpack.c.b16 %v186, %v182
  %v247 = vpack.c.b16 %v191, %v187
  %v248 = vpack.c.b16 %v192, %v188
  %v249 = vpack.c.b16 %v193, %v189
  %v250 = vpack.c.b16 %v194, %v190
  %v251 = vpack.c.b16 %v199, %v195
  %v252 = vpack.c.b16 %v200, %v196
  %v253 = vpack.c.b16 %v201, %v197
  %v254 = vpack.c.b16 %v202, %v198
  %v255 = vpack.c.b16 %v207, %v203
  %v256 = vpack.c.b16 %v208, %v204
  %v257 = vpack.c.b16 %v209, %v205
  %v258 = vpack.c.b16 %v210, %v206
  %v259 = vpack.c.b16 %v215, %v211
  %v260 = vpack.c.b16 %v216, %v212
  %v261 = vpack.c.b16 %v217, %v213
  %v262 = vpack.c.b16 %v218, %v214
  %v263 = vpack.c.b16 %v223, %v219
  %v264 = vpack.c.b16 %v224, %v220
  %v265 = vpack.c.b16 %v225, %v221
  %v266 = vpack.c.b16 %v226, %v222
  %v267 = vpack.c.b16 %v231, %v227
  %v268 = vpack.c.b16 %v232, %v228
  %v269 = vpack.c.b16 %v233, %v229
  %v270 = vpack.c.b16 %v234, %v230
  %v271 = vpack.c.b16 %v239, %v235
  %v272 = vpack.c.b16 %v240, %v236
  %v273 = vpack.c.b16 %v241, %v237
  %v274 = vpack.c.b16 %v242, %v238
  %307 = vmatprep.subr.bf16.mxu0 %v244
  %308 = vmatpush1.bf16.msra.mxu0 %v243
  %309 = vmatprep.subr.bf16.mxu0 %v248
  %310 = vmatpush1.bf16.msra.mxu0 %v247
  %311 = vmatprep.subr.bf16.mxu0 %v252
  %312 = vmatpush1.bf16.msra.mxu0 %v251
  %313 = vmatprep.subr.bf16.mxu0 %v256
  %314 = vmatpush1.bf16.msra.mxu0 %v255
  %315 = vmatprep.subr.bf16.mxu0 %v260
  %316 = vmatpush1.bf16.msra.mxu0 %v259
  %317 = vmatprep.subr.bf16.mxu0 %v264
  %318 = vmatpush1.bf16.msra.mxu0 %v263
  %319 = vmatprep.subr.bf16.mxu0 %v268
  %320 = vmatpush1.bf16.msra.mxu0 %v267
  %321 = vmatprep.subr.bf16.mxu0 %v272
  %322 = vmatpush1.bf16.msra.mxu0 %v271
  %323 = vmatprep.subr.bf16.mxu0 0
  %324 = vmatpush1.bf16.msra.mxu0 0
  %325 = vmatprep.subr.bf16.mxu0 0
  %326 = vmatpush1.bf16.msra.mxu0 0
  %327 = vmatprep.subr.bf16.mxu0 0
  %328 = vmatpush1.bf16.msra.mxu0 0
  %329 = vmatprep.subr.bf16.mxu0 0
  %330 = vmatpush1.bf16.msra.mxu0 0
  %331 = vmatprep.subr.bf16.mxu0 0
  %332 = vmatpush1.bf16.msra.mxu0 0
  %333 = vmatprep.subr.bf16.mxu0 0
  %334 = vmatpush1.bf16.msra.mxu0 0
  %335 = vmatprep.subr.bf16.mxu0 0
  %336 = vmatpush1.bf16.msra.mxu0 0
  %337 = vmatprep.subr.bf16.mxu0 0
  %338 = vmatpush1.bf16.msra.mxu0 0
  %339 = vmatprep.mubr.bf16.mxu0 0
  %340 = vmatmul.mubr.bf16.gmra.mrb[0].mxu0 %v139
  %v341 = vpop.f32.mrb[0].mxu0
  %v342 = vadd.f32 0.0, %v341
  %v343 = vpop.f32.mrb[0].mxu0
  %v344 = vadd.f32 0.0, %v343
  %v345 = vpop.f32.mrb[0].mxu0
  %v346 = vadd.f32 0.0, %v345
  %v347 = vpop.f32.mrb[0].mxu0
  %v348 = vadd.f32 0.0, %v347
  %349 = vmatprep.mubr.bf16.mxu0 0
  %350 = vmatmul.mubr.bf16.gmra.mrb[0].mxu0 %v140
  %v351 = vpop.f32.mrb[0].mxu0
  %v352 = vadd.f32 0.0, %v351
  %v353 = vpop.f32.mrb[0].mxu0
  %v354 = vadd.f32 0.0, %v353
  %v355 = vpop.f32.mrb[0].mxu0
  %v356 = vadd.f32 0.0, %v355
  %v357 = vpop.f32.mrb[0].mxu0
  %v358 = vadd.f32 0.0, %v357
  %359 = vmatprep.mubr.bf16.mxu0 0
  %360 = vmatmul.mubr.bf16.gmra.mrb[0].mxu0 %v141
  %v361 = vpop.f32.mrb[0].mxu0
  %v362 = vadd.f32 0.0, %v361
  %v363 = vpop.f32.mrb[0].mxu0
  %v364 = vadd.f32 0.0, %v363
  %v365 = vpop.f32.mrb[0].mxu0
  %v366 = vadd.f32 0.0, %v365
  %v367 = vpop.f32.mrb[0].mxu0
  %v368 = vadd.f32 0.0, %v367
  %369 = vmatprep.mubr.bf16.mxu0 0
  %370 = vmatmul.mubr.bf16.gmra.mrb[0].mxu0 %v142
  %v371 = vpop.f32.mrb[0].mxu0
  %v372 = vadd.f32 0.0, %v371
  %v373 = vpop.f32.mrb[0].mxu0
  %v374 = vadd.f32 0.0, %v373
  %v375 = vpop.f32.mrb[0].mxu0
  %v376 = vadd.f32 0.0, %v375
  %v377 = vpop.f32.mrb[0].mxu0
  %v378 = vadd.f32 0.0, %v377
  %379 = vdwg.mxu0
  %380 = vmatprep.subr.bf16.mxu0 %v246
  %381 = vmatpush1.bf16.msra.mxu0 %v245
  %382 = vmatprep.subr.bf16.mxu0 %v250
  %383 = vmatpush1.bf16.msra.mxu0 %v249
  %384 = vmatprep.subr.bf16.mxu0 %v254
  %385 = vmatpush1.bf16.msra.mxu0 %v253
  %386 = vmatprep.subr.bf16.mxu0 %v258
  %387 = vmatpush1.bf16.msra.mxu0 %v257
  %388 = vmatprep.subr.bf16.mxu0 %v262
  %389 = vmatpush1.bf16.msra.mxu0 %v261
  %390 = vmatprep.subr.bf16.mxu0 %v266
  %391 = vmatpush1.bf16.msra.mxu0 %v265
  %392 = vmatprep.subr.bf16.mxu0 %v270
  %393 = vmatpush1.bf16.msra.mxu0 %v269
  %394 = vmatprep.subr.bf16.mxu0 %v274
  %395 = vmatpush1.bf16.msra.mxu0 %v273
  %396 = vmatprep.subr.bf16.mxu0 0
  %397 = vmatpush1.bf16.msra.mxu0 0
  %398 = vmatprep.subr.bf16.mxu0 0
  %399 = vmatpush1.bf16.msra.mxu0 0
  %400 = vmatprep.subr.bf16.mxu0 0
  %401 = vmatpush1.bf16.msra.mxu0 0
  %402 = vmatprep.subr.bf16.mxu0 0
  %403 = vmatpush1.bf16.msra.mxu0 0
  %404 = vmatprep.subr.bf16.mxu0 0
  %405 = vmatpush1.bf16.msra.mxu0 0
  %406 = vmatprep.subr.bf16.mxu0 0
  %407 = vmatpush1.bf16.msra.mxu0 0
  %408 = vmatprep.subr.bf16.mxu0 0
  %409 = vmatpush1.bf16.msra.mxu0 0
  %410 = vmatprep.subr.bf16.mxu0 0
  %411 = vmatpush1.bf16.msra.mxu0 0
  %412 = vmatprep.mubr.bf16.mxu0 0
  %413 = vmatmul.mubr.bf16.gmra.mrb[0].mxu0 %v139
  %v414 = vpop.f32.mrb[0].mxu0
  %v415 = vadd.f32 0.0, %v414
  %v416 = vpop.f32.mrb[0].mxu0
  %v417 = vadd.f32 0.0, %v416
  %v418 = vpop.f32.mrb[0].mxu0
  %v419 = vadd.f32 0.0, %v418
  %v420 = vpop.f32.mrb[0].mxu0
  %v421 = vadd.f32 0.0, %v420
  %422 = vmatprep.mubr.bf16.mxu0 0
  %423 = vmatmul.mubr.bf16.gmra.mrb[0].mxu0 %v140
  %v424 = vpop.f32.mrb[0].mxu0
  %v425 = vadd.f32 0.0, %v424
  %v426 = vpop.f32.mrb[0].mxu0
  %v427 = vadd.f32 0.0, %v426
  %v428 = vpop.f32.mrb[0].mxu0
  %v429 = vadd.f32 0.0, %v428
  %v430 = vpop.f32.mrb[0].mxu0
  %v431 = vadd.f32 0.0, %v430
  %432 = vmatprep.mubr.bf16.mxu0 0
  %433 = vmatmul.mubr.bf16.gmra.mrb[0].mxu0 %v141
  %v434 = vpop.f32.mrb[0].mxu0
  %v435 = vadd.f32 0.0, %v434
  %v436 = vpop.f32.mrb[0].mxu0
  %v437 = vadd.f32 0.0, %v436
  %v438 = vpop.f32.mrb[0].mxu0
  %v439 = vadd.f32 0.0, %v438
  %v440 = vpop.f32.mrb[0].mxu0
  %v441 = vadd.f32 0.0, %v440
  %442 = vmatprep.mubr.bf16.mxu0 0
  %443 = vmatmul.mubr.bf16.gmra.mrb[0].mxu0 %v142
  %v444 = vpop.f32.mrb[0].mxu0
  %v445 = vadd.f32 0.0, %v444
  %v446 = vpop.f32.mrb[0].mxu0
  %v447 = vadd.f32 0.0, %v446
  %v448 = vpop.f32.mrb[0].mxu0
  %v449 = vadd.f32 0.0, %v448
  %v450 = vpop.f32.mrb[0].mxu0
  %v451 = vadd.f32 0.0, %v450
  %452 = vdwg.mxu0
  %v453 = vadd.f32 %v51, %v342
  %v454 = vadd.f32 %v52, %v344
  %v455 = vadd.f32 %v53, %v415
  %v456 = vadd.f32 %v54, %v417
  %v457 = vadd.f32 %v55, %v346
  %v458 = vadd.f32 %v56, %v348
  %v459 = vadd.f32 %v57, %v419
  %v460 = vadd.f32 %v58, %v421
  %v461 = vadd.f32 %v59, %v352
  %v462 = vadd.f32 %v60, %v354
  %v463 = vadd.f32 %v61, %v425
  %v464 = vadd.f32 %v62, %v427
  %v465 = vadd.f32 %v63, %v356
  %v466 = vadd.f32 %v64, %v358
  %v467 = vadd.f32 %v65, %v429
  %v468 = vadd.f32 %v66, %v431
  %v469 = vadd.f32 %v67, %v362
  %v470 = vadd.f32 %v68, %v364
  %v471 = vadd.f32 %v69, %v435
  %v472 = vadd.f32 %v70, %v437
  %v473 = vadd.f32 %v71, %v366
  %v474 = vadd.f32 %v72, %v368
  %v475 = vadd.f32 %v73, %v439
  %v476 = vadd.f32 %v74, %v441
  %v477 = vadd.f32 %v75, %v372
  %v478 = vadd.f32 %v76, %v374
  %v479 = vadd.f32 %v77, %v445
  %v480 = vadd.f32 %v78, %v447
  %v481 = vadd.f32 %v79, %v376
  %v482 = vadd.f32 %v80, %v378
  %v483 = vadd.f32 %v81, %v449
  %v484 = vadd.f32 %v82, %v451
  %485 = vst [vmem:[#allocation2] sm:$0xff] %v453
  %486 = vst [vmem:[#allocation2 + $0x8] sm:$0xff] %v454
  %487 = vst [vmem:[#allocation2 + $0x10] sm:$0xff] %v455
  %488 = vst [vmem:[#allocation2 + $0x18] sm:$0xff] %v456
  %489 = vst [vmem:[#allocation2 + $0x20] sm:$0xff] %v457
  %490 = vst [vmem:[#allocation2 + $0x28] sm:$0xff] %v458
  %491 = vst [vmem:[#allocation2 + $0x30] sm:$0xff] %v459
  %492 = vst [vmem:[#allocation2 + $0x38] sm:$0xff] %v460
  %493 = vst [vmem:[#allocation2 + $0x40] sm:$0xff] %v461
  %494 = vst [vmem:[#allocation2 + $0x48] sm:$0xff] %v462
  %495 = vst [vmem:[#allocation2 + $0x50] sm:$0xff] %v463
  %496 = vst [vmem:[#allocation2 + $0x58] sm:$0xff] %v464
  %497 = vst [vmem:[#allocation2 + $0x60] sm:$0xff] %v465
  %498 = vst [vmem:[#allocation2 + $0x68] sm:$0xff] %v466
  %499 = vst [vmem:[#allocation2 + $0x70] sm:$0xff] %v467
  %500 = vst [vmem:[#allocation2 + $0x78] sm:$0xff] %v468
  %501 = vst [vmem:[#allocation2 + $0x80] sm:$0xff] %v469
  %502 = vst [vmem:[#allocation2 + $0x88] sm:$0xff] %v470
  %503 = vst [vmem:[#allocation2 + $0x90] sm:$0xff] %v471
  %504 = vst [vmem:[#allocation2 + $0x98] sm:$0xff] %v472
  %505 = vst [vmem:[#allocation2 + $0xa0] sm:$0xff] %v473
  %506 = vst [vmem:[#allocation2 + $0xa8] sm:$0xff] %v474
  %507 = vst [vmem:[#allocation2 + $0xb0] sm:$0xff] %v475
  %508 = vst [vmem:[#allocation2 + $0xb8] sm:$0xff] %v476
  %509 = vst [vmem:[#allocation2 + $0xc0] sm:$0xff] %v477
  %510 = vst [vmem:[#allocation2 + $0xc8] sm:$0xff] %v478
  %511 = vst [vmem:[#allocation2 + $0xd0] sm:$0xff] %v479
  %512 = vst [vmem:[#allocation2 + $0xd8] sm:$0xff] %v480
  %513 = vst [vmem:[#allocation2 + $0xe0] sm:$0xff] %v481
  %514 = vst [vmem:[#allocation2 + $0xe8] sm:$0xff] %v482
  %515 = vst [vmem:[#allocation2 + $0xf0] sm:$0xff] %v483
  %516 = vst [vmem:[#allocation2 + $0xf8] sm:$0xff] %v484
  // Predicated region
  $region18: #{decoder_rnn_forward.7} parent=0 // pred_check
    %p517 = pneg %p15
  $region19: #{decoder_rnn_forward.7} parent=0 // pred_check_branch
    %519 = sbr.rel (%p517) target = $region21
  $region20: #{decoder_rnn_forward.7} parent=0 // pred_region
    %v520 = vld [vmem:[#allocation2] sm:$0xff]
    %v521 = vld [vmem:[#allocation2 + $0x8] sm:$0xff]
    %v522 = vld [vmem:[#allocation2 + $0x10] sm:$0xff]
    %v523 = vld [vmem:[#allocation2 + $0x18] sm:$0xff]
    %v524 = vld [vmem:[#allocation2 + $0x20] sm:$0xff]
    %v525 = vld [vmem:[#allocation2 + $0x28] sm:$0xff]
    %v526 = vld [vmem:[#allocation2 + $0x30] sm:$0xff]
    %v527 = vld [vmem:[#allocation2 + $0x38] sm:$0xff]
    %v528 = vld [vmem:[#allocation2 + $0x40] sm:$0xff]
    %v529 = vld [vmem:[#allocation2 + $0x48] sm:$0xff]
    %v530 = vld [vmem:[#allocation2 + $0x50] sm:$0xff]
    %v531 = vld [vmem:[#allocation2 + $0x58] sm:$0xff]
    %v532 = vld [vmem:[#allocation2 + $0x60] sm:$0xff]
    %v533 = vld [vmem:[#allocation2 + $0x68] sm:$0xff]
    %v534 = vld [vmem:[#allocation2 + $0x70] sm:$0xff]
    %v535 = vld [vmem:[#allocation2 + $0x78] sm:$0xff]
    %v536 = vld [vmem:[#allocation2 + $0x80] sm:$0xff]
    %v537 = vld [vmem:[#allocation2 + $0x88] sm:$0xff]
    %v538 = vld [vmem:[#allocation2 + $0x90] sm:$0xff]
    %v539 = vld [vmem:[#allocation2 + $0x98] sm:$0xff]
    %v540 = vld [vmem:[#allocation2 + $0xa0] sm:$0xff]
    %v541 = vld [vmem:[#allocation2 + $0xa8] sm:$0xff]
    %v542 = vld [vmem:[#allocation2 + $0xb0] sm:$0xff]
    %v543 = vld [vmem:[#allocation2 + $0xb8] sm:$0xff]
    %v544 = vld [vmem:[#allocation2 + $0xc0] sm:$0xff]
    %v545 = vld [vmem:[#allocation2 + $0xc8] sm:$0xff]
    %v546 = vld [vmem:[#allocation2 + $0xd0] sm:$0xff]
    %v547 = vld [vmem:[#allocation2 + $0xd8] sm:$0xff]
    %v548 = vld [vmem:[#allocation2 + $0xe0] sm:$0xff]
    %v549 = vld [vmem:[#allocation2 + $0xe8] sm:$0xff]
    %v550 = vld [vmem:[#allocation2 + $0xf0] sm:$0xff]
    %v551 = vld [vmem:[#allocation2 + $0xf8] sm:$0xff]
    %v552 = vld [vmem:[%s2] sm:$0xf]
    %v554 = vlaneseq
    %v555 = vshrl.u32 %v554, 7
    %v556 = vsub.s32 0, %v555
    %v557 = vrot.slane %v552, %v556
    %v558 = vlaneseq
    %v559 = vshrl.u32 %v558, 7
    %v560 = vsub.s32 1, %v559
    %v561 = vrot.slane %v552, %v560
    %v562 = vlaneseq
    %v563 = vshrl.u32 %v562, 7
    %v564 = vsub.s32 2, %v563
    %v565 = vrot.slane %v552, %v564
    %v566 = vlaneseq
    %v567 = vshrl.u32 %v566, 7
    %v568 = vsub.s32 3, %v567
    %v569 = vrot.slane %v552, %v568
    %v574 = vadd.f32 %v520, %v557
    %v575 = vadd.f32 %v521, %v561
    %v576 = vadd.f32 %v522, %v565
    %v577 = vadd.f32 %v523, %v569
    %v578 = vadd.f32 %v524, %v557
    %v579 = vadd.f32 %v525, %v561
    %v580 = vadd.f32 %v526, %v565
    %v581 = vadd.f32 %v527, %v569
    %v582 = vadd.f32 %v528, %v557
    %v583 = vadd.f32 %v529, %v561
    %v584 = vadd.f32 %v530, %v565
    %v585 = vadd.f32 %v531, %v569
    %v586 = vadd.f32 %v532, %v557
    %v587 = vadd.f32 %v533, %v561
    %v588 = vadd.f32 %v534, %v565
    %v589 = vadd.f32 %v535, %v569
    %v590 = vadd.f32 %v536, %v557
    %v591 = vadd.f32 %v537, %v561
    %v592 = vadd.f32 %v538, %v565
    %v593 = vadd.f32 %v539, %v569
    %v594 = vadd.f32 %v540, %v557
    %v595 = vadd.f32 %v541, %v561
    %v596 = vadd.f32 %v542, %v565
    %v597 = vadd.f32 %v543, %v569
    %v598 = vadd.f32 %v544, %v557
    %v599 = vadd.f32 %v545, %v561
    %v600 = vadd.f32 %v546, %v565
    %v601 = vadd.f32 %v547, %v569
    %v602 = vadd.f32 %v548, %v557
    %v603 = vadd.f32 %v549, %v561
    %v604 = vadd.f32 %v550, %v565
    %v605 = vadd.f32 %v551, %v569
    %606 = vst [vmem:[%s3] sm:$0xff] %v574
    %607 = vst [vmem:[%s3 + $0x8] sm:$0xff] %v575
    %608 = vst [vmem:[%s3 + $0x10] sm:$0xff] %v576
    %609 = vst [vmem:[%s3 + $0x18] sm:$0xff] %v577
    %610 = vst [vmem:[%s3 + $0x20] sm:$0xff] %v578
    %611 = vst [vmem:[%s3 + $0x28] sm:$0xff] %v579
    %612 = vst [vmem:[%s3 + $0x30] sm:$0xff] %v580
    %613 = vst [vmem:[%s3 + $0x38] sm:$0xff] %v581
    %614 = vst [vmem:[%s3 + $0x40] sm:$0xff] %v582
    %615 = vst [vmem:[%s3 + $0x48] sm:$0xff] %v583
    %616 = vst [vmem:[%s3 + $0x50] sm:$0xff] %v584
    %617 = vst [vmem:[%s3 + $0x58] sm:$0xff] %v585
    %618 = vst [vmem:[%s3 + $0x60] sm:$0xff] %v586
    %619 = vst [vmem:[%s3 + $0x68] sm:$0xff] %v587
    %620 = vst [vmem:[%s3 + $0x70] sm:$0xff] %v588
    %621 = vst [vmem:[%s3 + $0x78] sm:$0xff] %v589
    %622 = vst [vmem:[%s3 + $0x80] sm:$0xff] %v590
    %623 = vst [vmem:[%s3 + $0x88] sm:$0xff] %v591
    %624 = vst [vmem:[%s3 + $0x90] sm:$0xff] %v592
    %625 = vst [vmem:[%s3 + $0x98] sm:$0xff] %v593
    %626 = vst [vmem:[%s3 + $0xa0] sm:$0xff] %v594
    %627 = vst [vmem:[%s3 + $0xa8] sm:$0xff] %v595
    %628 = vst [vmem:[%s3 + $0xb0] sm:$0xff] %v596
    %629 = vst [vmem:[%s3 + $0xb8] sm:$0xff] %v597
    %630 = vst [vmem:[%s3 + $0xc0] sm:$0xff] %v598
    %631 = vst [vmem:[%s3 + $0xc8] sm:$0xff] %v599
    %632 = vst [vmem:[%s3 + $0xd0] sm:$0xff] %v600
    %633 = vst [vmem:[%s3 + $0xd8] sm:$0xff] %v601
    %634 = vst [vmem:[%s3 + $0xe0] sm:$0xff] %v602
    %635 = vst [vmem:[%s3 + $0xe8] sm:$0xff] %v603
    %636 = vst [vmem:[%s3 + $0xf0] sm:$0xff] %v604
    %637 = vst [vmem:[%s3 + $0xf8] sm:$0xff] %v605
  $region21: #{decoder_rnn_forward.7} parent=0 // pred_fallthru
    _
  // Predicated region
  $region22: #{decoder_rnn_forward.7} parent=0 // pred_check
    _
  $region23: #{decoder_rnn_forward.7} parent=0 // pred_check_branch
    %639 = sbr.rel (0) target = $region25
  $region24: #{decoder_rnn_forward.7} parent=0 // pred_region
    _
  $region25: #{decoder_rnn_forward.7} parent=0 // pred_fallthru
    _
  // Predicated region
  $region26: #{decoder_rnn_forward.7} parent=0 // pred_check
    _
  $region27: #{decoder_rnn_forward.7} parent=0 // pred_check_branch
    %641 = sbr.rel (0) target = $region29
  $region28: #{decoder_rnn_forward.7} parent=0 // pred_region
    _
  $region29: #{decoder_rnn_forward.7} parent=0 // pred_fallthru
    _

</llo_original>
